<compile_context>
chip_gen: v6e
topology: v6e:2x2x1
jax: 0.10.0
libtpu: 0.0.40
codegen_flags: <defaults>
</compile_context>

<pallas_src>
import numpy as np
import jax
import jax.numpy as jnp
from jax.experimental import pallas as pl
from jax.experimental.pallas import tpu as pltpu


HIDDEN = 128            # MlpModel default hidden_sizes = [128] * 3
MAX_ROW_TILE = 1024     # upper bound on rows per grid step


def _mlp_kernel(x_ref, w1_ref, b1_ref, w2_ref, b2_ref, w3_ref, b3_ref,
                w4_ref, b4_ref, o_ref):
    """Fused 4-layer MLP: (linear o relu) x3 then linear (lane-dense output)."""
    x = x_ref[...].astype(jnp.float32)   # cast on-chip; hidden under the DMA

    h = jnp.dot(x, w1_ref[...], preferred_element_type=jnp.float32) + b1_ref[...]
    h = jnp.maximum(h, 0.0)

    h = jnp.dot(h, w2_ref[...], preferred_element_type=jnp.float32) + b2_ref[...]
    h = jnp.maximum(h, 0.0)

    h = jnp.dot(h, w3_ref[...], preferred_element_type=jnp.float32) + b3_ref[...]
    h = jnp.maximum(h, 0.0)

    q = jnp.dot(h, w4_ref[...], preferred_element_type=jnp.float32) + b4_ref[...]
    o_ref[...] = q.astype(o_ref.dtype)


def _vmem_capacity_bytes():
    """Physical VMEM of the local chip (per TensorCore on v7x)."""
    try:
        return int(pltpu.get_tpu_info().vmem_capacity_bytes)
    except Exception:
        return 64 * 1024 * 1024   # conservative fallback (v7x per-TC VMEM)


def _choose_row_tile(rows, in_dim, itemsize, x_budget_bytes):
    """Row tile: large enough to keep the MXU/DMA busy, bounded by the
    per-buffer VMEM budget, sublane-aligned for the input dtype, and split
    at least two ways when there is enough work (v7x megacore)."""
    pack = max(1, 4 // max(1, itemsize))
    min_rows = 8 * pack                       # f32: 8, bf16: 16, u8: 32
    if rows <= min_rows:
        return min_rows                       # one tiny (padded) tile
    cap = x_budget_bytes // max(1, in_dim * itemsize)
    cap = min(cap, MAX_ROW_TILE)
    if rows >= 256:                           # leave work for both v7x cores
        cap = min(cap, -(-rows // 2))
    tile = max(min_rows, min(cap, rows))
    # Align for MXU M granularity / unmasked stores.
    if tile >= 256:
        tile = (tile // 256) * 256
    elif tile >= 128:
        tile = 128
    else:
        tile = max(min_rows, (tile // min_rows) * min_rows)
    return tile


def _build_mlp_call(row_tile, in_dim, out_cols, n_blocks, out_rows,
                    vmem_limit, cost, single_buffer_weights):
    if single_buffer_weights:
        def wspec(shape):
            # Constant index_map -> the block is resident; one buffer suffices.
            return pl.BlockSpec(shape, lambda i: (0, 0),
                                pipeline_mode=pl.Buffered(1))
    else:
        def wspec(shape):
            return pl.BlockSpec(shape, lambda i: (0, 0))

    return pl.pallas_call(
        _mlp_kernel,
        out_shape=jax.ShapeDtypeStruct((out_rows, out_cols), jnp.float32),
        grid_spec=pltpu.PrefetchScalarGridSpec(
            num_scalar_prefetch=0,
            grid=(n_blocks,),
            in_specs=[
                pl.BlockSpec((row_tile, in_dim), lambda i: (i, 0)),  # x tile
                wspec((in_dim, HIDDEN)),    # w1 (resident)
                wspec((1, HIDDEN)),         # b1
                wspec((HIDDEN, HIDDEN)),    # w2
                wspec((1, HIDDEN)),         # b2
                wspec((HIDDEN, HIDDEN)),    # w3
                wspec((1, HIDDEN)),         # b3
                wspec((HIDDEN, out_cols)),  # w4 (lane-dense padded)
                wspec((1, out_cols)),       # b4 (lane-dense padded)
            ],
            out_specs=pl.BlockSpec((row_tile, out_cols), lambda i: (i, 0)),
        ),
        compiler_params=pltpu.CompilerParams(
            dimension_semantics=("parallel",),      # megacore sharding on v7x
            vmem_limit_bytes=int(vmem_limit)),
        cost_estimate=cost,
    )


def mlp_pallas(x_flat, params, action_size):
    """x_flat: (rows, input_size), any float/int dtype (cast to f32 in-kernel).
    params: ((w1,b1),(w2,b2),(w3,b3),(w4p,b4p)) with the last layer already
    zero-padded to a lane-dense multiple of 128 columns (prepare_params).
    Returns (rows, action_size) f32."""
    (w1, b1), (w2, b2), (w3, b3), (w4, b4) = params
    rows, in_dim = x_flat.shape
    out_cols = w4.shape[1]
    itemsize = x_flat.dtype.itemsize

    vmem_cap = _vmem_capacity_bytes()
    x_budget = max(2 << 20, vmem_cap // 8)        # per x pipeline buffer
    row_tile = _choose_row_tile(rows, in_dim, itemsize, x_budget)

    # Only tiny batches (rows < one sublane tile) are padded; everything else
    # relies on Pallas' partial-edge-block handling (reads past the end are
    # harmless in this row-independent MLP, writes past the end are masked).
    if rows < row_tile:
        x_flat = jnp.pad(x_flat, ((0, row_tile - rows), (0, 0)))
        out_rows = row_tile
    else:
        out_rows = rows
    n_blocks = pl.cdiv(out_rows, row_tile)

    # VMEM: x double-buffered, weights single-buffered, output double-buffered,
    # plus f32 working copies of the activations; generous headroom.
    w_elems = (in_dim * HIDDEN + 2 * HIDDEN * HIDDEN + HIDDEN * out_cols
               + 3 * HIDDEN + out_cols)
    vmem_need = (2 * row_tile * in_dim * itemsize          # x pipeline buffers
                 + 4 * w_elems                             # resident weights
                 + 2 * row_tile * out_cols * 4             # out pipeline buffers
                 + row_tile * (in_dim + 3 * HIDDEN) * 4    # f32 activations
                 + (8 << 20))                              # headroom
    vmem_limit = min(vmem_cap, max(32 << 20, vmem_need))

    flops_per_row = 2 * (in_dim * HIDDEN + 2 * HIDDEN * HIDDEN + HIDDEN * out_cols)
    cost = pl.CostEstimate(
        flops=int(out_rows * flops_per_row),
        transcendentals=0,
        bytes_accessed=int(out_rows * in_dim * itemsize + 4 * w_elems
                           + out_rows * out_cols * 4),
    )

    args = (x_flat, w1, b1, w2, b2, w3, b3, w4, b4)
    try:
        out = _build_mlp_call(row_tile, in_dim, out_cols, n_blocks, out_rows,
                              vmem_limit, cost, True)(*args)
    except Exception:
        # Fallback if single-buffered weight specs (pl.Buffered(1)) are not
        # accepted by this Pallas build; correctness is identical.
        out = _build_mlp_call(row_tile, in_dim, out_cols, n_blocks, out_rows,
                              vmem_limit, cost, False)(*args)

    # Slice away row/column padding (tiny; fuse with the consumer if it ever
    # shows up in traces).
    return out[:rows, :action_size]


def init_params(key, input_size, action_size):
    """Deterministic init matching torch.nn.Linear shapes (stored transposed
    as (in, out) for row-major matmul); uniform(-1/sqrt(fan_in), 1/sqrt(fan_in))
    like PyTorch's default."""
    sizes = [input_size, HIDDEN, HIDDEN, HIDDEN, action_size]
    params = []
    for fan_in, fan_out in zip(sizes[:-1], sizes[1:]):
        key, kw, kb = jax.random.split(key, 3)
        bound = 1.0 / np.sqrt(fan_in)
        w = jax.random.uniform(kw, (fan_in, fan_out), jnp.float32, -bound, bound)
        b = jax.random.uniform(kb, (1, fan_out), jnp.float32, -bound, bound)
        params.append((w, b))
    return params


def prepare_params(params):
    """One-time layout prep (hoisted out of the per-call forward path):
    zero-pad the output layer to a lane-dense multiple of 128 columns so the
    final matmul N and the output store are full-width."""
    (w4, b4) = params[-1]
    act = w4.shape[1]
    out_cols = max(128, pl.cdiv(act, 128) * 128)
    pad = out_cols - act
    if pad:
        w4 = jnp.pad(w4, ((0, 0), (0, pad)))
        b4 = jnp.pad(b4, ((0, 0), (0, pad)))
    return tuple(params[:-1]) + ((w4, b4),)


def model_dqn_nn_discrete_forward(observation, prev_action, prev_reward,
                                  params, obs_ndim, action_size):
    """Equivalent of ModelDQNNNDiscrete.forward.  prev_action / prev_reward
    are accepted but unused, exactly as in the PyTorch module."""
    obs_shape = observation.shape[observation.ndim - obs_ndim:]
    lead_shape = observation.shape[:observation.ndim - obs_ndim]
    rows = int(np.prod(lead_shape)) if lead_shape else 1
    # No host-side dtype cast: the kernel DMAs the native dtype and casts to
    # f32 on-chip (cuts x HBM traffic for narrow observation dtypes).
    obs_flat = observation.reshape(rows, int(np.prod(obs_shape)))
    q = mlp_pallas(obs_flat, params, action_size)
    return q.reshape(lead_shape + (action_size,))


def reference_forward(observation, raw_params, obs_ndim):
    obs_shape = observation.shape[observation.ndim - obs_ndim:]
    lead_shape = observation.shape[:observation.ndim - obs_ndim]
    rows = int(np.prod(lead_shape)) if lead_shape else 1
    x = observation.reshape(rows, int(np.prod(obs_shape))).astype(jnp.float32)
    (w1, b1), (w2, b2), (w3, b3), (w4, b4) = raw_params
    h = jnp.maximum(x @ w1 + b1, 0.0)
    h = jnp.maximum(h @ w2 + b2, 0.0)
    h = jnp.maximum(h @ w3 + b3, 0.0)
    q = h @ w4 + b4
    return q.reshape(lead_shape + (q.shape[-1],))


if __name__ == "__main__":
    key = jax.random.PRNGKey(0)
    k_obs, k_params = jax.random.split(key)

    observation_shape = (4, 16, 16)      # obs_ndim = 3, input_size = 1024
    action_size = 6
    B = 2                                # single leading (batch) dim

    obs = jax.random.normal(k_obs, (B,) + observation_shape, jnp.float32)
    prev_action = jnp.zeros((B,), jnp.int32)     # unused, as in the module
    prev_reward = jnp.zeros((B,), jnp.float32)   # unused, as in the module

    raw_params = init_params(k_params, int(np.prod(observation_shape)),
                             action_size)
    params = prepare_params(raw_params)          # one-time lane-dense padding

    q = model_dqn_nn_discrete_forward(obs, prev_action, prev_reward, params,
                                      obs_ndim=len(observation_shape),
                                      action_size=action_size)
    q = jax.block_until_ready(q)

    q_ref = reference_forward(obs, raw_params, obs_ndim=len(observation_shape))
    np.testing.assert_allclose(np.asarray(q), np.asarray(q_ref),
                               rtol=1e-5, atol=1e-5)
    assert q.shape == (B, action_size)

    # Larger T,B leading-dim case: multi-step grid (>=2 steps for megacore),
    # lane-dense output, no host-side batch padding.
    T2, B2 = 4, 64
    obs2 = jax.random.normal(jax.random.PRNGKey(1),
                             (T2, B2) + observation_shape, jnp.float32)
    q2 = model_dqn_nn_discrete_forward(obs2, None, None, params,
                                       obs_ndim=len(observation_shape),
                                       action_size=action_size)
    q2 = jax.block_until_ready(q2)
    q2_ref = reference_forward(obs2, raw_params,
                               obs_ndim=len(observation_shape))
    np.testing.assert_allclose(np.asarray(q2), np.asarray(q2_ref),
                               rtol=1e-5, atol=1e-5)
    assert q2.shape == (T2, B2, action_size)

    print("KERNEL_OK")
</pallas_src>

<mosaic_0001>
module attributes {stable_mosaic.version = 11 : i64} {
  func.func @_mlp_kernel(%arg0: i32, %arg1: memref<8x1024xf32, #tpu.memory_space<vmem>>, %arg2: memref<1024x128xf32, #tpu.memory_space<vmem>>, %arg3: memref<1x128xf32, #tpu.memory_space<vmem>>, %arg4: memref<128x128xf32, #tpu.memory_space<vmem>>, %arg5: memref<1x128xf32, #tpu.memory_space<vmem>>, %arg6: memref<128x128xf32, #tpu.memory_space<vmem>>, %arg7: memref<1x128xf32, #tpu.memory_space<vmem>>, %arg8: memref<128x128xf32, #tpu.memory_space<vmem>>, %arg9: memref<1x128xf32, #tpu.memory_space<vmem>>, %arg10: memref<8x128xf32, #tpu.memory_space<vmem>>) attributes {dimension_semantics = [#tpu.dimension_semantics<parallel>], iteration_bounds = array<i64: 1>, scalar_prefetch = 0 : i64, scratch_operands = 0 : i64, tpu.core_type = #tpu.core_type<tc>, window_params = [{transform_indices = @transform_0, window_bounds = array<i64: 8, 1024>}, {pipeline_mode = #tpu.pipeline_mode<synchronous>, transform_indices = @transform_1, window_bounds = array<i64: 1024, 128>}, {pipeline_mode = #tpu.pipeline_mode<synchronous>, transform_indices = @transform_2, window_bounds = array<i64: 1, 128>}, {pipeline_mode = #tpu.pipeline_mode<synchronous>, transform_indices = @transform_3, window_bounds = array<i64: 128, 128>}, {pipeline_mode = #tpu.pipeline_mode<synchronous>, transform_indices = @transform_4, window_bounds = array<i64: 1, 128>}, {pipeline_mode = #tpu.pipeline_mode<synchronous>, transform_indices = @transform_5, window_bounds = array<i64: 128, 128>}, {pipeline_mode = #tpu.pipeline_mode<synchronous>, transform_indices = @transform_6, window_bounds = array<i64: 1, 128>}, {pipeline_mode = #tpu.pipeline_mode<synchronous>, transform_indices = @transform_7, window_bounds = array<i64: 128, 128>}, {pipeline_mode = #tpu.pipeline_mode<synchronous>, transform_indices = @transform_8, window_bounds = array<i64: 1, 128>}, {transform_indices = @transform_9, window_bounds = array<i64: 8, 128>}]} {
    %c0 = arith.constant 0 : index
    %c0_0 = arith.constant 0 : index
    %0 = vector.load %arg1[%c0, %c0_0] : memref<8x1024xf32, #tpu.memory_space<vmem>>, vector<8x1024xf32>
    %c0_1 = arith.constant 0 : index
    %c0_2 = arith.constant 0 : index
    %1 = vector.load %arg2[%c0_1, %c0_2] : memref<1024x128xf32, #tpu.memory_space<vmem>>, vector<1024x128xf32>
    %cst = arith.constant dense<0.000000e+00> : vector<8x128xf32>
    %2 = tpu.matmul %0, %1, %cst {dimension_numbers = #tpu.dot_dimension_numbers<[1], [0], [0], [1], [0, 0, 1, 1], [], []>} : vector<8x1024xf32>, vector<1024x128xf32>, vector<8x128xf32> -> vector<8x128xf32>
    %c0_3 = arith.constant 0 : index
    %c0_4 = arith.constant 0 : index
    %3 = vector.load %arg3[%c0_3, %c0_4] : memref<1x128xf32, #tpu.memory_space<vmem>>, vector<1x128xf32>
    %4 = vector.broadcast %3 : vector<1x128xf32> to vector<8x128xf32>
    %5 = arith.addf %2, %4 : vector<8x128xf32>
    %cst_5 = arith.constant 0.000000e+00 : f32
    %6 = vector.broadcast %cst_5 : f32 to vector<8x128xf32>
    %7 = arith.maximumf %5, %6 : vector<8x128xf32>
    %c0_6 = arith.constant 0 : index
    %c0_7 = arith.constant 0 : index
    %8 = vector.load %arg4[%c0_6, %c0_7] : memref<128x128xf32, #tpu.memory_space<vmem>>, vector<128x128xf32>
    %cst_8 = arith.constant dense<0.000000e+00> : vector<8x128xf32>
    %9 = tpu.matmul %7, %8, %cst_8 {dimension_numbers = #tpu.dot_dimension_numbers<[1], [0], [0], [1], [0, 0, 1, 1], [], []>} : vector<8x128xf32>, vector<128x128xf32>, vector<8x128xf32> -> vector<8x128xf32>
    %c0_9 = arith.constant 0 : index
    %c0_10 = arith.constant 0 : index
    %10 = vector.load %arg5[%c0_9, %c0_10] : memref<1x128xf32, #tpu.memory_space<vmem>>, vector<1x128xf32>
    %11 = vector.broadcast %10 : vector<1x128xf32> to vector<8x128xf32>
    %12 = arith.addf %9, %11 : vector<8x128xf32>
    %cst_11 = arith.constant 0.000000e+00 : f32
    %13 = vector.broadcast %cst_11 : f32 to vector<8x128xf32>
    %14 = arith.maximumf %12, %13 : vector<8x128xf32>
    %c0_12 = arith.constant 0 : index
    %c0_13 = arith.constant 0 : index
    %15 = vector.load %arg6[%c0_12, %c0_13] : memref<128x128xf32, #tpu.memory_space<vmem>>, vector<128x128xf32>
    %cst_14 = arith.constant dense<0.000000e+00> : vector<8x128xf32>
    %16 = tpu.matmul %14, %15, %cst_14 {dimension_numbers = #tpu.dot_dimension_numbers<[1], [0], [0], [1], [0, 0, 1, 1], [], []>} : vector<8x128xf32>, vector<128x128xf32>, vector<8x128xf32> -> vector<8x128xf32>
    %c0_15 = arith.constant 0 : index
    %c0_16 = arith.constant 0 : index
    %17 = vector.load %arg7[%c0_15, %c0_16] : memref<1x128xf32, #tpu.memory_space<vmem>>, vector<1x128xf32>
    %18 = vector.broadcast %17 : vector<1x128xf32> to vector<8x128xf32>
    %19 = arith.addf %16, %18 : vector<8x128xf32>
    %cst_17 = arith.constant 0.000000e+00 : f32
    %20 = vector.broadcast %cst_17 : f32 to vector<8x128xf32>
    %21 = arith.maximumf %19, %20 : vector<8x128xf32>
    %c0_18 = arith.constant 0 : index
    %c0_19 = arith.constant 0 : index
    %22 = vector.load %arg8[%c0_18, %c0_19] : memref<128x128xf32, #tpu.memory_space<vmem>>, vector<128x128xf32>
    %cst_20 = arith.constant dense<0.000000e+00> : vector<8x128xf32>
    %23 = tpu.matmul %21, %22, %cst_20 {dimension_numbers = #tpu.dot_dimension_numbers<[1], [0], [0], [1], [0, 0, 1, 1], [], []>} : vector<8x128xf32>, vector<128x128xf32>, vector<8x128xf32> -> vector<8x128xf32>
    %c0_21 = arith.constant 0 : index
    %c0_22 = arith.constant 0 : index
    %24 = vector.load %arg9[%c0_21, %c0_22] : memref<1x128xf32, #tpu.memory_space<vmem>>, vector<1x128xf32>
    %25 = vector.broadcast %24 : vector<1x128xf32> to vector<8x128xf32>
    %26 = arith.addf %23, %25 : vector<8x128xf32>
    %c0_23 = arith.constant 0 : index
    %c0_24 = arith.constant 0 : index
    %27 = vector.load %arg10[%c0_23, %c0_24] : memref<8x128xf32, #tpu.memory_space<vmem>>, vector<8x128xf32>
    tpu.vector_store %arg10[%c0_23, %c0_24], %26 {strides = array<i32>} : memref<8x128xf32, #tpu.memory_space<vmem>>, vector<8x128xf32>,
    return
  }
  func.func @transform_0(%arg0: i32) -> (i32, i32) {
    %c0_i32 = arith.constant 0 : i32
    %c0_i32_0 = arith.constant 0 : i32
    return %arg0, %c0_i32 : i32, i32
  }
  func.func @transform_1(%arg0: i32) -> (i32, i32) {
    %c0_i32 = arith.constant 0 : i32
    %c0_i32_0 = arith.constant 0 : i32
    %c0_i32_1 = arith.constant 0 : i32
    return %c0_i32, %c0_i32_0 : i32, i32
  }
  func.func @transform_2(%arg0: i32) -> (i32, i32) {
    %c0_i32 = arith.constant 0 : i32
    %c0_i32_0 = arith.constant 0 : i32
    %c0_i32_1 = arith.constant 0 : i32
    return %c0_i32, %c0_i32_0 : i32, i32
  }
  func.func @transform_3(%arg0: i32) -> (i32, i32) {
    %c0_i32 = arith.constant 0 : i32
    %c0_i32_0 = arith.constant 0 : i32
    %c0_i32_1 = arith.constant 0 : i32
    return %c0_i32, %c0_i32_0 : i32, i32
  }
  func.func @transform_4(%arg0: i32) -> (i32, i32) {
    %c0_i32 = arith.constant 0 : i32
    %c0_i32_0 = arith.constant 0 : i32
    %c0_i32_1 = arith.constant 0 : i32
    return %c0_i32, %c0_i32_0 : i32, i32
  }
  func.func @transform_5(%arg0: i32) -> (i32, i32) {
    %c0_i32 = arith.constant 0 : i32
    %c0_i32_0 = arith.constant 0 : i32
    %c0_i32_1 = arith.constant 0 : i32
    return %c0_i32, %c0_i32_0 : i32, i32
  }
  func.func @transform_6(%arg0: i32) -> (i32, i32) {
    %c0_i32 = arith.constant 0 : i32
    %c0_i32_0 = arith.constant 0 : i32
    %c0_i32_1 = arith.constant 0 : i32
    return %c0_i32, %c0_i32_0 : i32, i32
  }
  func.func @transform_7(%arg0: i32) -> (i32, i32) {
    %c0_i32 = arith.constant 0 : i32
    %c0_i32_0 = arith.constant 0 : i32
    %c0_i32_1 = arith.constant 0 : i32
    return %c0_i32, %c0_i32_0 : i32, i32
  }
  func.func @transform_8(%arg0: i32) -> (i32, i32) {
    %c0_i32 = arith.constant 0 : i32
    %c0_i32_0 = arith.constant 0 : i32
    %c0_i32_1 = arith.constant 0 : i32
    return %c0_i32, %c0_i32_0 : i32, i32
  }
  func.func @transform_9(%arg0: i32) -> (i32, i32) {
    %c0_i32 = arith.constant 0 : i32
    %c0_i32_0 = arith.constant 0 : i32
    return %arg0, %c0_i32 : i32, i32
  }
}

module attributes {stable_mosaic.version = 11 : i64} {
  func.func @_mlp_kernel(%arg0: i32, %arg1: memref<8x1024xf32, #tpu.memory_space<vmem>>, %arg2: memref<1024x128xf32, #tpu.memory_space<vmem>>, %arg3: memref<1x128xf32, #tpu.memory_space<vmem>>, %arg4: memref<128x128xf32, #tpu.memory_space<vmem>>, %arg5: memref<1x128xf32, #tpu.memory_space<vmem>>, %arg6: memref<128x128xf32, #tpu.memory_space<vmem>>, %arg7: memref<1x128xf32, #tpu.memory_space<vmem>>, %arg8: memref<128x128xf32, #tpu.memory_space<vmem>>, %arg9: memref<1x128xf32, #tpu.memory_space<vmem>>, %arg10: memref<8x128xf32, #tpu.memory_space<vmem>>) attributes {dimension_semantics = [#tpu.dimension_semantics<parallel>], iteration_bounds = array<i64: 1>, scalar_prefetch = 0 : i64, scratch_operands = 0 : i64, tpu.core_type = #tpu.core_type<tc>, window_params = [{transform_indices = @transform_0, window_bounds = array<i64: 8, 1024>}, {pipeline_mode = #tpu.pipeline_mode<synchronous>, transform_indices = @transform_1, window_bounds = array<i64: 1024, 128>}, {pipeline_mode = #tpu.pipeline_mode<synchronous>, transform_indices = @transform_2, window_bounds = array<i64: 1, 128>}, {pipeline_mode = #tpu.pipeline_mode<synchronous>, transform_indices = @transform_3, window_bounds = array<i64: 128, 128>}, {pipeline_mode = #tpu.pipeline_mode<synchronous>, transform_indices = @transform_4, window_bounds = array<i64: 1, 128>}, {pipeline_mode = #tpu.pipeline_mode<synchronous>, transform_indices = @transform_5, window_bounds = array<i64: 128, 128>}, {pipeline_mode = #tpu.pipeline_mode<synchronous>, transform_indices = @transform_6, window_bounds = array<i64: 1, 128>}, {pipeline_mode = #tpu.pipeline_mode<synchronous>, transform_indices = @transform_7, window_bounds = array<i64: 128, 128>}, {pipeline_mode = #tpu.pipeline_mode<synchronous>, transform_indices = @transform_8, window_bounds = array<i64: 1, 128>}, {transform_indices = @transform_9, window_bounds = array<i64: 8, 128>}]} {
    %c0 = arith.constant 0 : index
    %c0_0 = arith.constant 0 : index
    %0 = vector.load %arg1[%c0, %c0_0] : memref<8x1024xf32, #tpu.memory_space<vmem>>, vector<8x1024xf32>
    %c0_1 = arith.constant 0 : index
    %c0_2 = arith.constant 0 : index
    %1 = vector.load %arg2[%c0_1, %c0_2] : memref<1024x128xf32, #tpu.memory_space<vmem>>, vector<1024x128xf32>
    %cst = arith.constant dense<0.000000e+00> : vector<8x128xf32>
    %2 = tpu.matmul %0, %1, %cst {dimension_numbers = #tpu.dot_dimension_numbers<[1], [0], [0], [1], [0, 0, 1, 1], [], []>} : vector<8x1024xf32>, vector<1024x128xf32>, vector<8x128xf32> -> vector<8x128xf32>
    %c0_3 = arith.constant 0 : index
    %c0_4 = arith.constant 0 : index
    %3 = vector.load %arg3[%c0_3, %c0_4] : memref<1x128xf32, #tpu.memory_space<vmem>>, vector<1x128xf32>
    %4 = vector.broadcast %3 : vector<1x128xf32> to vector<8x128xf32>
    %5 = arith.addf %2, %4 : vector<8x128xf32>
    %cst_5 = arith.constant 0.000000e+00 : f32
    %6 = vector.broadcast %cst_5 : f32 to vector<8x128xf32>
    %7 = arith.maximumf %5, %6 : vector<8x128xf32>
    %c0_6 = arith.constant 0 : index
    %c0_7 = arith.constant 0 : index
    %8 = vector.load %arg4[%c0_6, %c0_7] : memref<128x128xf32, #tpu.memory_space<vmem>>, vector<128x128xf32>
    %cst_8 = arith.constant dense<0.000000e+00> : vector<8x128xf32>
    %9 = tpu.matmul %7, %8, %cst_8 {dimension_numbers = #tpu.dot_dimension_numbers<[1], [0], [0], [1], [0, 0, 1, 1], [], []>} : vector<8x128xf32>, vector<128x128xf32>, vector<8x128xf32> -> vector<8x128xf32>
    %c0_9 = arith.constant 0 : index
    %c0_10 = arith.constant 0 : index
    %10 = vector.load %arg5[%c0_9, %c0_10] : memref<1x128xf32, #tpu.memory_space<vmem>>, vector<1x128xf32>
    %11 = vector.broadcast %10 : vector<1x128xf32> to vector<8x128xf32>
    %12 = arith.addf %9, %11 : vector<8x128xf32>
    %cst_11 = arith.constant 0.000000e+00 : f32
    %13 = vector.broadcast %cst_11 : f32 to vector<8x128xf32>
    %14 = arith.maximumf %12, %13 : vector<8x128xf32>
    %c0_12 = arith.constant 0 : index
    %c0_13 = arith.constant 0 : index
    %15 = vector.load %arg6[%c0_12, %c0_13] : memref<128x128xf32, #tpu.memory_space<vmem>>, vector<128x128xf32>
    %cst_14 = arith.constant dense<0.000000e+00> : vector<8x128xf32>
    %16 = tpu.matmul %14, %15, %cst_14 {dimension_numbers = #tpu.dot_dimension_numbers<[1], [0], [0], [1], [0, 0, 1, 1], [], []>} : vector<8x128xf32>, vector<128x128xf32>, vector<8x128xf32> -> vector<8x128xf32>
    %c0_15 = arith.constant 0 : index
    %c0_16 = arith.constant 0 : index
    %17 = vector.load %arg7[%c0_15, %c0_16] : memref<1x128xf32, #tpu.memory_space<vmem>>, vector<1x128xf32>
    %18 = vector.broadcast %17 : vector<1x128xf32> to vector<8x128xf32>
    %19 = arith.addf %16, %18 : vector<8x128xf32>
    %cst_17 = arith.constant 0.000000e+00 : f32
    %20 = vector.broadcast %cst_17 : f32 to vector<8x128xf32>
    %21 = arith.maximumf %19, %20 : vector<8x128xf32>
    %c0_18 = arith.constant 0 : index
    %c0_19 = arith.constant 0 : index
    %22 = vector.load %arg8[%c0_18, %c0_19] : memref<128x128xf32, #tpu.memory_space<vmem>>, vector<128x128xf32>
    %cst_20 = arith.constant dense<0.000000e+00> : vector<8x128xf32>
    %23 = tpu.matmul %21, %22, %cst_20 {dimension_numbers = #tpu.dot_dimension_numbers<[1], [0], [0], [1], [0, 0, 1, 1], [], []>} : vector<8x128xf32>, vector<128x128xf32>, vector<8x128xf32> -> vector<8x128xf32>
    %c0_21 = arith.constant 0 : index
    %c0_22 = arith.constant 0 : index
    %24 = vector.load %arg9[%c0_21, %c0_22] : memref<1x128xf32, #tpu.memory_space<vmem>>, vector<1x128xf32>
    %25 = vector.broadcast %24 : vector<1x128xf32> to vector<8x128xf32>
    %26 = arith.addf %23, %25 : vector<8x128xf32>
    %c0_23 = arith.constant 0 : index
    %c0_24 = arith.constant 0 : index
    %27 = vector.load %arg10[%c0_23, %c0_24] : memref<8x128xf32, #tpu.memory_space<vmem>>, vector<8x128xf32>
    tpu.vector_store %arg10[%c0_23, %c0_24], %26 {strides = array<i32>} : memref<8x128xf32, #tpu.memory_space<vmem>>, vector<8x128xf32>,
    return
  }
  func.func @transform_0(%arg0: i32) -> (i32, i32) {
    %c0_i32 = arith.constant 0 : i32
    %c0_i32_0 = arith.constant 0 : i32
    return %arg0, %c0_i32 : i32, i32
  }
  func.func @transform_1(%arg0: i32) -> (i32, i32) {
    %c0_i32 = arith.constant 0 : i32
    %c0_i32_0 = arith.constant 0 : i32
    %c0_i32_1 = arith.constant 0 : i32
    return %c0_i32, %c0_i32_0 : i32, i32
  }
  func.func @transform_2(%arg0: i32) -> (i32, i32) {
    %c0_i32 = arith.constant 0 : i32
    %c0_i32_0 = arith.constant 0 : i32
    %c0_i32_1 = arith.constant 0 : i32
    return %c0_i32, %c0_i32_0 : i32, i32
  }
  func.func @transform_3(%arg0: i32) -> (i32, i32) {
    %c0_i32 = arith.constant 0 : i32
    %c0_i32_0 = arith.constant 0 : i32
    %c0_i32_1 = arith.constant 0 : i32
    return %c0_i32, %c0_i32_0 : i32, i32
  }
  func.func @transform_4(%arg0: i32) -> (i32, i32) {
    %c0_i32 = arith.constant 0 : i32
    %c0_i32_0 = arith.constant 0 : i32
    %c0_i32_1 = arith.constant 0 : i32
    return %c0_i32, %c0_i32_0 : i32, i32
  }
  func.func @transform_5(%arg0: i32) -> (i32, i32) {
    %c0_i32 = arith.constant 0 : i32
    %c0_i32_0 = arith.constant 0 : i32
    %c0_i32_1 = arith.constant 0 : i32
    return %c0_i32, %c0_i32_0 : i32, i32
  }
  func.func @transform_6(%arg0: i32) -> (i32, i32) {
    %c0_i32 = arith.constant 0 : i32
    %c0_i32_0 = arith.constant 0 : i32
    %c0_i32_1 = arith.constant 0 : i32
    return %c0_i32, %c0_i32_0 : i32, i32
  }
  func.func @transform_7(%arg0: i32) -> (i32, i32) {
    %c0_i32 = arith.constant 0 : i32
    %c0_i32_0 = arith.constant 0 : i32
    %c0_i32_1 = arith.constant 0 : i32
    return %c0_i32, %c0_i32_0 : i32, i32
  }
  func.func @transform_8(%arg0: i32) -> (i32, i32) {
    %c0_i32 = arith.constant 0 : i32
    %c0_i32_0 = arith.constant 0 : i32
    %c0_i32_1 = arith.constant 0 : i32
    return %c0_i32, %c0_i32_0 : i32, i32
  }
  func.func @transform_9(%arg0: i32) -> (i32, i32) {
    %c0_i32 = arith.constant 0 : i32
    %c0_i32_0 = arith.constant 0 : i32
    return %arg0, %c0_i32 : i32, i32
  }
}

</mosaic_0001>

<llo_original>
// kernel: tpu_custom_call.1
$region0: #{tpu_custom_call.1}
  #allocation0 [shape = 'u32[]', space=smem, size = 0x4, offset = 0x4, fixed_abs, tag = 'smem constant byte address 0x4 - core index']
  #allocation1 [shape = 'u32[144,128]{1,0:T(1,128)}', space=vmem, size = 0x12000, scoped, tag = 'internal scratch']
  %s0 = inlined_call_operand.hbm [shape: f32[8,1024], index: 0, kind: input, shape index: {}]
  %s1 = inlined_call_operand.hbm [shape: f32[1024,128], index: 1, kind: input, shape index: {}]
  %s2 = inlined_call_operand.vmem [shape: f32[1,128], index: 2, kind: input, shape index: {}]
  %s3 = inlined_call_operand.hbm [shape: f32[128,128], index: 3, kind: input, shape index: {}]
  %s4 = inlined_call_operand.vmem [shape: f32[1,128], index: 4, kind: input, shape index: {}]
  %s5 = inlined_call_operand.hbm [shape: f32[128,128], index: 5, kind: input, shape index: {}]
  %s6 = inlined_call_operand.vmem [shape: f32[1,128], index: 6, kind: input, shape index: {}]
  %s7 = inlined_call_operand.hbm [shape: f32[128,128], index: 7, kind: input, shape index: {}]
  %s8 = inlined_call_operand.vmem [shape: f32[1,128], index: 8, kind: input, shape index: {}]
  %s9 = inlined_call_operand.hbm [shape: f32[8,128], index: 9, kind: output, shape index: {}]
  %s10 = sld [smem:[#allocation0]]
  $region66: #{tpu_custom_call.1} parent=0
    _
  %s12 = ssub.s32 1, %s10
  %s13 = scalar_select 0, %s12, %s10
  $region1: #{tpu_custom_call.1} parent=0
    #allocation2 [shape = 'u8[32768]{0}', space=vmem, size = 0x8000, scoped, tag = 'input window, operand 0, single buffered']
    #allocation3 [shape = 's32[1]{0}', space=sflag, size = 0x4, scoped, tag = 'scoped memory for tpu_custom_call.1']
    #allocation4 [shape = 's32[1]{0}', space=sflag, size = 0x4, scoped, tag = 'scoped memory for tpu_custom_call.1']
    #allocation5 [shape = 'u8[524288]{0}', space=vmem, size = 0x80000, scoped, tag = 'input window, operand 1, single buffered']
    #allocation6 [shape = 's32[1]{0}', space=sflag, size = 0x4, scoped, tag = 'scoped memory for tpu_custom_call.1']
    #allocation7 [shape = 'u8[65536]{0}', space=vmem, size = 0x10000, scoped, tag = 'input window, operand 3, single buffered']
    #allocation8 [shape = 'u8[65536]{0}', space=vmem, size = 0x10000, scoped, tag = 'input window, operand 5, single buffered']
    #allocation9 [shape = 's32[1]{0}', space=sflag, size = 0x4, scoped, tag = 'scoped memory for tpu_custom_call.1']
    #allocation10 [shape = 'u8[65536]{0}', space=vmem, size = 0x10000, scoped, tag = 'input window, operand 7, single buffered']
    #allocation11 [shape = 'u8[4096]{0}', space=vmem, size = 0x1000, scoped, tag = 'output window, operand 0, single buffered']
    %14 = vsyncpa [#allocation3], 0
    %15 = vsyncpa [#allocation6], 0
    %16 = vsyncpa [#allocation9], 0
    %17 = vsyncpa [#allocation4], 0
    // Predicated region
    $region2: #{tpu_custom_call.1} parent=1 // pred_check
      _
    $region3: #{tpu_custom_call.1} parent=1 // pred_check_branch
      %19 = sbr.rel (0) target = $region5
    $region4: #{tpu_custom_call.1} parent=1 // pred_region
      %s21 = ssub.s32 1024, 1024
      %22 = vsyncadd [#allocation3], %s21
      %s24 = sshll.u32 [#allocation2], 4
      %s25 = int_to_ptr.vmem [resolvable:$true] %s24
      %27 = dma.hbm_to_vmem [thread:$0]  %s0, 1024, %s25, [#allocation3]
    $region5: #{tpu_custom_call.1} parent=1 // pred_fallthru
      _
    // Predicated region
    $region6: #{tpu_custom_call.1} parent=1 // pred_check
      _
    $region7: #{tpu_custom_call.1} parent=1 // pred_check_branch
      %29 = sbr.rel (0) target = $region9
    $region8: #{tpu_custom_call.1} parent=1 // pred_region
      %s31 = ssub.s32 16384, 16384
      %32 = vsyncadd [#allocation6], %s31
      %s33 = sshll.u32 [#allocation5], 4
      %s34 = int_to_ptr.vmem [resolvable:$true] %s33
      %39 = dma.hbm_to_vmem [thread:$0]  %s1, 16384, %s34, [#allocation6], 128, 128, 8
    $region9: #{tpu_custom_call.1} parent=1 // pred_fallthru
      _
    // Predicated region
    $region10: #{tpu_custom_call.1} parent=1 // pred_check
      _
    $region11: #{tpu_custom_call.1} parent=1 // pred_check_branch
      %41 = sbr.rel (0) target = $region13
    $region12: #{tpu_custom_call.1} parent=1 // pred_region
      _
    $region13: #{tpu_custom_call.1} parent=1 // pred_fallthru
      _
    // Predicated region
    $region14: #{tpu_custom_call.1} parent=1 // pred_check
      _
    $region15: #{tpu_custom_call.1} parent=1 // pred_check_branch
      %43 = sbr.rel (0) target = $region17
    $region16: #{tpu_custom_call.1} parent=1 // pred_region
      %s45 = ssub.s32 2048, 2048
      %46 = vsyncadd [#allocation6], %s45
      %s47 = sshll.u32 [#allocation7], 4
      %s48 = int_to_ptr.vmem [resolvable:$true] %s47
      %53 = dma.hbm_to_vmem [thread:$0]  %s3, 2048, %s48, [#allocation6], 128, 128, 8
    $region17: #{tpu_custom_call.1} parent=1 // pred_fallthru
      _
    // Predicated region
    $region18: #{tpu_custom_call.1} parent=1 // pred_check
      _
    $region19: #{tpu_custom_call.1} parent=1 // pred_check_branch
      %55 = sbr.rel (0) target = $region21
    $region20: #{tpu_custom_call.1} parent=1 // pred_region
      _
    $region21: #{tpu_custom_call.1} parent=1 // pred_fallthru
      _
    // Predicated region
    $region22: #{tpu_custom_call.1} parent=1 // pred_check
      _
    $region23: #{tpu_custom_call.1} parent=1 // pred_check_branch
      %57 = sbr.rel (0) target = $region25
    $region24: #{tpu_custom_call.1} parent=1 // pred_region
      %s59 = ssub.s32 2048, 2048
      %60 = vsyncadd [#allocation9], %s59
      %s61 = sshll.u32 [#allocation8], 4
      %s62 = int_to_ptr.vmem [resolvable:$true] %s61
      %67 = dma.hbm_to_vmem [thread:$0]  %s5, 2048, %s62, [#allocation9], 128, 128, 8
    $region25: #{tpu_custom_call.1} parent=1 // pred_fallthru
      _
    // Predicated region
    $region26: #{tpu_custom_call.1} parent=1 // pred_check
      _
    $region27: #{tpu_custom_call.1} parent=1 // pred_check_branch
      %69 = sbr.rel (0) target = $region29
    $region28: #{tpu_custom_call.1} parent=1 // pred_region
      _
    $region29: #{tpu_custom_call.1} parent=1 // pred_fallthru
      _
    // Predicated region
    $region30: #{tpu_custom_call.1} parent=1 // pred_check
      _
    $region31: #{tpu_custom_call.1} parent=1 // pred_check_branch
      %71 = sbr.rel (0) target = $region33
    $region32: #{tpu_custom_call.1} parent=1 // pred_region
      %s73 = ssub.s32 2048, 2048
      %74 = vsyncadd [#allocation9], %s73
      %s75 = sshll.u32 [#allocation10], 4
      %s76 = int_to_ptr.vmem [resolvable:$true] %s75
      %81 = dma.hbm_to_vmem [thread:$0]  %s7, 2048, %s76, [#allocation9], 128, 128, 8
    $region33: #{tpu_custom_call.1} parent=1 // pred_fallthru
      _
    // Predicated region
    $region34: #{tpu_custom_call.1} parent=1 // pred_check
      _
    $region35: #{tpu_custom_call.1} parent=1 // pred_check_branch
      %83 = sbr.rel (0) target = $region37
    $region36: #{tpu_custom_call.1} parent=1 // pred_region
      _
    $region37: #{tpu_custom_call.1} parent=1 // pred_fallthru
      _
    // Predicated region
    $region38: #{tpu_custom_call.1} parent=1 // pred_check
      _
    $region39: #{tpu_custom_call.1} parent=1 // pred_check_branch
      %85 = sbr.rel (0) target = $region41
    $region40: #{tpu_custom_call.1} parent=1 // pred_region
      %86 = dma.done [#allocation3], 1024
    $region41: #{tpu_custom_call.1} parent=1 // pred_fallthru
      _
    // Predicated region
    $region42: #{tpu_custom_call.1} parent=1 // pred_check
      _
    $region43: #{tpu_custom_call.1} parent=1 // pred_check_branch
      %88 = sbr.rel (0) target = $region45
    $region44: #{tpu_custom_call.1} parent=1 // pred_region
      %89 = dma.done [#allocation6], 16384
    $region45: #{tpu_custom_call.1} parent=1 // pred_fallthru
      _
    // Predicated region
    $region46: #{tpu_custom_call.1} parent=1 // pred_check
      _
    $region47: #{tpu_custom_call.1} parent=1 // pred_check_branch
      %91 = sbr.rel (0) target = $region49
    $region48: #{tpu_custom_call.1} parent=1 // pred_region
      %92 = dma.done [#allocation6], 2048
    $region49: #{tpu_custom_call.1} parent=1 // pred_fallthru
      _
    // Predicated region
    $region50: #{tpu_custom_call.1} parent=1 // pred_check
      _
    $region51: #{tpu_custom_call.1} parent=1 // pred_check_branch
      %94 = sbr.rel (0) target = $region53
    $region52: #{tpu_custom_call.1} parent=1 // pred_region
      %95 = dma.done [#allocation9], 2048
    $region53: #{tpu_custom_call.1} parent=1 // pred_fallthru
      _
    // Predicated region
    $region54: #{tpu_custom_call.1} parent=1 // pred_check
      _
    $region55: #{tpu_custom_call.1} parent=1 // pred_check_branch
      %97 = sbr.rel (0) target = $region57
    $region56: #{tpu_custom_call.1} parent=1 // pred_region
      %98 = dma.done [#allocation9], 2048
    $region57: #{tpu_custom_call.1} parent=1 // pred_fallthru
      _
    %v99 = vld [vmem:[#allocation2] sm:$0xff]
    %v100 = vld [vmem:[#allocation2 + $0x8] sm:$0xff]
    %v101 = vld [vmem:[#allocation2 + $0x10] sm:$0xff]
    %v102 = vld [vmem:[#allocation2 + $0x18] sm:$0xff]
    %v103 = vld [vmem:[#allocation2 + $0x20] sm:$0xff]
    %v104 = vld [vmem:[#allocation2 + $0x28] sm:$0xff]
    %v105 = vld [vmem:[#allocation2 + $0x30] sm:$0xff]
    %v106 = vld [vmem:[#allocation2 + $0x38] sm:$0xff]
    %v107 = vld [vmem:[#allocation5] sm:$0xff]
    %v108 = vld [vmem:[#allocation5 + $0x8] sm:$0xff]
    %v109 = vld [vmem:[#allocation5 + $0x10] sm:$0xff]
    %v110 = vld [vmem:[#allocation5 + $0x18] sm:$0xff]
    %v111 = vld [vmem:[#allocation5 + $0x20] sm:$0xff]
    %v112 = vld [vmem:[#allocation5 + $0x28] sm:$0xff]
    %v113 = vld [vmem:[#allocation5 + $0x30] sm:$0xff]
    %v114 = vld [vmem:[#allocation5 + $0x38] sm:$0xff]
    %v115 = vld [vmem:[#allocation5 + $0x40] sm:$0xff]
    %v116 = vld [vmem:[#allocation5 + $0x48] sm:$0xff]
    %v117 = vld [vmem:[#allocation5 + $0x50] sm:$0xff]
    %v118 = vld [vmem:[#allocation5 + $0x58] sm:$0xff]
    %v119 = vld [vmem:[#allocation5 + $0x60] sm:$0xff]
    %v120 = vld [vmem:[#allocation5 + $0x68] sm:$0xff]
    %v121 = vld [vmem:[#allocation5 + $0x70] sm:$0xff]
    %v122 = vld [vmem:[#allocation5 + $0x78] sm:$0xff]
    %v123 = vld [vmem:[#allocation5 + $0x80] sm:$0xff]
    %v124 = vld [vmem:[#allocation5 + $0x88] sm:$0xff]
    %v125 = vld [vmem:[#allocation5 + $0x90] sm:$0xff]
    %v126 = vld [vmem:[#allocation5 + $0x98] sm:$0xff]
    %v127 = vld [vmem:[#allocation5 + $0xa0] sm:$0xff]
    %v128 = vld [vmem:[#allocation5 + $0xa8] sm:$0xff]
    %v129 = vld [vmem:[#allocation5 + $0xb0] sm:$0xff]
    %v130 = vld [vmem:[#allocation5 + $0xb8] sm:$0xff]
    %v131 = vld [vmem:[#allocation5 + $0xc0] sm:$0xff]
    %v132 = vld [vmem:[#allocation5 + $0xc8] sm:$0xff]
    %v133 = vld [vmem:[#allocation5 + $0xd0] sm:$0xff]
    %v134 = vld [vmem:[#allocation5 + $0xd8] sm:$0xff]
    %v135 = vld [vmem:[#allocation5 + $0xe0] sm:$0xff]
    %v136 = vld [vmem:[#allocation5 + $0xe8] sm:$0xff]
    %v137 = vld [vmem:[#allocation5 + $0xf0] sm:$0xff]
    %v138 = vld [vmem:[#allocation5 + $0xf8] sm:$0xff]
    %v139 = vld [vmem:[#allocation5 + $0x100] sm:$0xff]
    %v140 = vld [vmem:[#allocation5 + $0x108] sm:$0xff]
    %v141 = vld [vmem:[#allocation5 + $0x110] sm:$0xff]
    %v142 = vld [vmem:[#allocation5 + $0x118] sm:$0xff]
    %v143 = vld [vmem:[#allocation5 + $0x120] sm:$0xff]
    %v144 = vld [vmem:[#allocation5 + $0x128] sm:$0xff]
    %v145 = vld [vmem:[#allocation5 + $0x130] sm:$0xff]
    %v146 = vld [vmem:[#allocation5 + $0x138] sm:$0xff]
    %v147 = vld [vmem:[#allocation5 + $0x140] sm:$0xff]
    %v148 = vld [vmem:[#allocation5 + $0x148] sm:$0xff]
    %v149 = vld [vmem:[#allocation5 + $0x150] sm:$0xff]
    %v150 = vld [vmem:[#allocation5 + $0x158] sm:$0xff]
    %v151 = vld [vmem:[#allocation5 + $0x160] sm:$0xff]
    %v152 = vld [vmem:[#allocation5 + $0x168] sm:$0xff]
    %v153 = vld [vmem:[#allocation5 + $0x170] sm:$0xff]
    %v154 = vld [vmem:[#allocation5 + $0x178] sm:$0xff]
    %v155 = vld [vmem:[#allocation5 + $0x180] sm:$0xff]
    %v156 = vld [vmem:[#allocation5 + $0x188] sm:$0xff]
    %v157 = vld [vmem:[#allocation5 + $0x190] sm:$0xff]
    %v158 = vld [vmem:[#allocation5 + $0x198] sm:$0xff]
    %v159 = vld [vmem:[#allocation5 + $0x1a0] sm:$0xff]
    %v160 = vld [vmem:[#allocation5 + $0x1a8] sm:$0xff]
    %v161 = vld [vmem:[#allocation5 + $0x1b0] sm:$0xff]
    %v162 = vld [vmem:[#allocation5 + $0x1b8] sm:$0xff]
    %v163 = vld [vmem:[#allocation5 + $0x1c0] sm:$0xff]
    %v164 = vld [vmem:[#allocation5 + $0x1c8] sm:$0xff]
    %v165 = vld [vmem:[#allocation5 + $0x1d0] sm:$0xff]
    %v166 = vld [vmem:[#allocation5 + $0x1d8] sm:$0xff]
    %v167 = vld [vmem:[#allocation5 + $0x1e0] sm:$0xff]
    %v168 = vld [vmem:[#allocation5 + $0x1e8] sm:$0xff]
    %v169 = vld [vmem:[#allocation5 + $0x1f0] sm:$0xff]
    %v170 = vld [vmem:[#allocation5 + $0x1f8] sm:$0xff]
    %v171 = vld [vmem:[#allocation5 + $0x200] sm:$0xff]
    %v172 = vld [vmem:[#allocation5 + $0x208] sm:$0xff]
    %v173 = vld [vmem:[#allocation5 + $0x210] sm:$0xff]
    %v174 = vld [vmem:[#allocation5 + $0x218] sm:$0xff]
    %v175 = vld [vmem:[#allocation5 + $0x220] sm:$0xff]
    %v176 = vld [vmem:[#allocation5 + $0x228] sm:$0xff]
    %v177 = vld [vmem:[#allocation5 + $0x230] sm:$0xff]
    %v178 = vld [vmem:[#allocation5 + $0x238] sm:$0xff]
    %v179 = vld [vmem:[#allocation5 + $0x240] sm:$0xff]
    %v180 = vld [vmem:[#allocation5 + $0x248] sm:$0xff]
    %v181 = vld [vmem:[#allocation5 + $0x250] sm:$0xff]
    %v182 = vld [vmem:[#allocation5 + $0x258] sm:$0xff]
    %v183 = vld [vmem:[#allocation5 + $0x260] sm:$0xff]
    %v184 = vld [vmem:[#allocation5 + $0x268] sm:$0xff]
    %v185 = vld [vmem:[#allocation5 + $0x270] sm:$0xff]
    %v186 = vld [vmem:[#allocation5 + $0x278] sm:$0xff]
    %v187 = vld [vmem:[#allocation5 + $0x280] sm:$0xff]
    %v188 = vld [vmem:[#allocation5 + $0x288] sm:$0xff]
    %v189 = vld [vmem:[#allocation5 + $0x290] sm:$0xff]
    %v190 = vld [vmem:[#allocation5 + $0x298] sm:$0xff]
    %v191 = vld [vmem:[#allocation5 + $0x2a0] sm:$0xff]
    %v192 = vld [vmem:[#allocation5 + $0x2a8] sm:$0xff]
    %v193 = vld [vmem:[#allocation5 + $0x2b0] sm:$0xff]
    %v194 = vld [vmem:[#allocation5 + $0x2b8] sm:$0xff]
    %v195 = vld [vmem:[#allocation5 + $0x2c0] sm:$0xff]
    %v196 = vld [vmem:[#allocation5 + $0x2c8] sm:$0xff]
    %v197 = vld [vmem:[#allocation5 + $0x2d0] sm:$0xff]
    %v198 = vld [vmem:[#allocation5 + $0x2d8] sm:$0xff]
    %v199 = vld [vmem:[#allocation5 + $0x2e0] sm:$0xff]
    %v200 = vld [vmem:[#allocation5 + $0x2e8] sm:$0xff]
    %v201 = vld [vmem:[#allocation5 + $0x2f0] sm:$0xff]
    %v202 = vld [vmem:[#allocation5 + $0x2f8] sm:$0xff]
    %v203 = vld [vmem:[#allocation5 + $0x300] sm:$0xff]
    %v204 = vld [vmem:[#allocation5 + $0x308] sm:$0xff]
    %v205 = vld [vmem:[#allocation5 + $0x310] sm:$0xff]
    %v206 = vld [vmem:[#allocation5 + $0x318] sm:$0xff]
    %v207 = vld [vmem:[#allocation5 + $0x320] sm:$0xff]
    %v208 = vld [vmem:[#allocation5 + $0x328] sm:$0xff]
    %v209 = vld [vmem:[#allocation5 + $0x330] sm:$0xff]
    %v210 = vld [vmem:[#allocation5 + $0x338] sm:$0xff]
    %v211 = vld [vmem:[#allocation5 + $0x340] sm:$0xff]
    %v212 = vld [vmem:[#allocation5 + $0x348] sm:$0xff]
    %v213 = vld [vmem:[#allocation5 + $0x350] sm:$0xff]
    %v214 = vld [vmem:[#allocation5 + $0x358] sm:$0xff]
    %v215 = vld [vmem:[#allocation5 + $0x360] sm:$0xff]
    %v216 = vld [vmem:[#allocation5 + $0x368] sm:$0xff]
    %v217 = vld [vmem:[#allocation5 + $0x370] sm:$0xff]
    %v218 = vld [vmem:[#allocation5 + $0x378] sm:$0xff]
    %v219 = vld [vmem:[#allocation5 + $0x380] sm:$0xff]
    %v220 = vld [vmem:[#allocation5 + $0x388] sm:$0xff]
    %v221 = vld [vmem:[#allocation5 + $0x390] sm:$0xff]
    %v222 = vld [vmem:[#allocation5 + $0x398] sm:$0xff]
    %v223 = vld [vmem:[#allocation5 + $0x3a0] sm:$0xff]
    %v224 = vld [vmem:[#allocation5 + $0x3a8] sm:$0xff]
    %v225 = vld [vmem:[#allocation5 + $0x3b0] sm:$0xff]
    %v226 = vld [vmem:[#allocation5 + $0x3b8] sm:$0xff]
    %v227 = vld [vmem:[#allocation5 + $0x3c0] sm:$0xff]
    %v228 = vld [vmem:[#allocation5 + $0x3c8] sm:$0xff]
    %v229 = vld [vmem:[#allocation5 + $0x3d0] sm:$0xff]
    %v230 = vld [vmem:[#allocation5 + $0x3d8] sm:$0xff]
    %v231 = vld [vmem:[#allocation5 + $0x3e0] sm:$0xff]
    %v232 = vld [vmem:[#allocation5 + $0x3e8] sm:$0xff]
    %v233 = vld [vmem:[#allocation5 + $0x3f0] sm:$0xff]
    %v234 = vld [vmem:[#allocation5 + $0x3f8] sm:$0xff]
    %v235 = vld [vmem:[%s2] sm:$0x1]
    %v237 = vlaneseq
    %v238 = vshrl.u32 %v237, 7
    %v239 = vsub.s32 0, %v238
    %v240 = vrot.slane %v235, %v239
    %242 = vmatprep.subr.mxu0 0.0
    %243 = vmatpush1.msra.mxu0 %v122
    %244 = vmatprep.subr.mxu0 0.0
    %245 = vmatpush1.msra.mxu0 %v121
    %246 = vmatprep.subr.mxu0 0.0
    %247 = vmatpush1.msra.mxu0 %v120
    %248 = vmatprep.subr.mxu0 0.0
    %249 = vmatpush1.msra.mxu0 %v119
    %250 = vmatprep.subr.mxu0 0.0
    %251 = vmatpush1.msra.mxu0 %v118
    %252 = vmatprep.subr.mxu0 0.0
    %253 = vmatpush1.msra.mxu0 %v117
    %254 = vmatprep.subr.mxu0 0.0
    %255 = vmatpush1.msra.mxu0 %v116
    %256 = vmatprep.subr.mxu0 0.0
    %257 = vmatpush1.msra.mxu0 %v115
    %258 = vmatprep.subr.mxu0 0.0
    %259 = vmatpush1.msra.mxu0 %v114
    %260 = vmatprep.subr.mxu0 0.0
    %261 = vmatpush1.msra.mxu0 %v113
    %262 = vmatprep.subr.mxu0 0.0
    %263 = vmatpush1.msra.mxu0 %v112
    %264 = vmatprep.subr.mxu0 0.0
    %265 = vmatpush1.msra.mxu0 %v111
    %266 = vmatprep.subr.mxu0 0.0
    %267 = vmatpush1.msra.mxu0 %v110
    %268 = vmatprep.subr.mxu0 0.0
    %269 = vmatpush1.msra.mxu0 %v109
    %270 = vmatprep.subr.mxu0 0.0
    %271 = vmatpush1.msra.mxu0 %v108
    %272 = vmatprep.subr.mxu0 0.0
    %273 = vmatpush1.msra.mxu0 %v107
    %274 = vmatprep.subr.mxu0 0.0
    %275 = vmatpush2.msra.mxu0 %v138
    %276 = vmatprep.subr.mxu0 0.0
    %277 = vmatpush2.msra.mxu0 %v137
    %278 = vmatprep.subr.mxu0 0.0
    %279 = vmatpush2.msra.mxu0 %v136
    %280 = vmatprep.subr.mxu0 0.0
    %281 = vmatpush2.msra.mxu0 %v135
    %282 = vmatprep.subr.mxu0 0.0
    %283 = vmatpush2.msra.mxu0 %v134
    %284 = vmatprep.subr.mxu0 0.0
    %285 = vmatpush2.msra.mxu0 %v133
    %286 = vmatprep.subr.mxu0 0.0
    %287 = vmatpush2.msra.mxu0 %v132
    %288 = vmatprep.subr.mxu0 0.0
    %289 = vmatpush2.msra.mxu0 %v131
    %290 = vmatprep.subr.mxu0 0.0
    %291 = vmatpush2.msra.mxu0 %v130
    %292 = vmatprep.subr.mxu0 0.0
    %293 = vmatpush2.msra.mxu0 %v129
    %294 = vmatprep.subr.mxu0 0.0
    %295 = vmatpush2.msra.mxu0 %v128
    %296 = vmatprep.subr.mxu0 0.0
    %297 = vmatpush2.msra.mxu0 %v127
    %298 = vmatprep.subr.mxu0 0.0
    %299 = vmatpush2.msra.mxu0 %v126
    %300 = vmatprep.subr.mxu0 0.0
    %301 = vmatpush2.msra.mxu0 %v125
    %302 = vmatprep.subr.mxu0 0.0
    %303 = vmatpush2.msra.mxu0 %v124
    %304 = vmatprep.subr.mxu0 0.0
    %305 = vmatpush2.msra.mxu0 %v123
    %306 = vmatprep.mubr.f32.mxu0 %v100
    %307 = vmatmul.mubr.f32.gmra.mxu0 %v99
    %v308 = vpop.f32.mrf.mxu0
    %v309 = vadd.f32 %v240, %v308
    %v310 = vpop.f32.mrf.mxu0
    %311 = vdwg.mxu0
    %312 = vmatprep.subr.mxu0 0.0
    %313 = vmatpush1.msra.mxu0 %v154
    %314 = vmatprep.subr.mxu0 0.0
    %315 = vmatpush1.msra.mxu0 %v153
    %316 = vmatprep.subr.mxu0 0.0
    %317 = vmatpush1.msra.mxu0 %v152
    %318 = vmatprep.subr.mxu0 0.0
    %319 = vmatpush1.msra.mxu0 %v151
    %320 = vmatprep.subr.mxu0 0.0
    %321 = vmatpush1.msra.mxu0 %v150
    %322 = vmatprep.subr.mxu0 0.0
    %323 = vmatpush1.msra.mxu0 %v149
    %324 = vmatprep.subr.mxu0 0.0
    %325 = vmatpush1.msra.mxu0 %v148
    %326 = vmatprep.subr.mxu0 0.0
    %327 = vmatpush1.msra.mxu0 %v147
    %328 = vmatprep.subr.mxu0 0.0
    %329 = vmatpush1.msra.mxu0 %v146
    %330 = vmatprep.subr.mxu0 0.0
    %331 = vmatpush1.msra.mxu0 %v145
    %332 = vmatprep.subr.mxu0 0.0
    %333 = vmatpush1.msra.mxu0 %v144
    %334 = vmatprep.subr.mxu0 0.0
    %335 = vmatpush1.msra.mxu0 %v143
    %336 = vmatprep.subr.mxu0 0.0
    %337 = vmatpush1.msra.mxu0 %v142
    %338 = vmatprep.subr.mxu0 0.0
    %339 = vmatpush1.msra.mxu0 %v141
    %340 = vmatprep.subr.mxu0 0.0
    %341 = vmatpush1.msra.mxu0 %v140
    %342 = vmatprep.subr.mxu0 0.0
    %343 = vmatpush1.msra.mxu0 %v139
    %344 = vmatprep.subr.mxu0 0.0
    %345 = vmatpush2.msra.mxu0 %v170
    %346 = vmatprep.subr.mxu0 0.0
    %347 = vmatpush2.msra.mxu0 %v169
    %348 = vmatprep.subr.mxu0 0.0
    %349 = vmatpush2.msra.mxu0 %v168
    %350 = vmatprep.subr.mxu0 0.0
    %351 = vmatpush2.msra.mxu0 %v167
    %352 = vmatprep.subr.mxu0 0.0
    %353 = vmatpush2.msra.mxu0 %v166
    %354 = vmatprep.subr.mxu0 0.0
    %355 = vmatpush2.msra.mxu0 %v165
    %356 = vmatprep.subr.mxu0 0.0
    %357 = vmatpush2.msra.mxu0 %v164
    %358 = vmatprep.subr.mxu0 0.0
    %359 = vmatpush2.msra.mxu0 %v163
    %360 = vmatprep.subr.mxu0 0.0
    %361 = vmatpush2.msra.mxu0 %v162
    %362 = vmatprep.subr.mxu0 0.0
    %363 = vmatpush2.msra.mxu0 %v161
    %364 = vmatprep.subr.mxu0 0.0
    %365 = vmatpush2.msra.mxu0 %v160
    %366 = vmatprep.subr.mxu0 0.0
    %367 = vmatpush2.msra.mxu0 %v159
    %368 = vmatprep.subr.mxu0 0.0
    %369 = vmatpush2.msra.mxu0 %v158
    %370 = vmatprep.subr.mxu0 0.0
    %371 = vmatpush2.msra.mxu0 %v157
    %372 = vmatprep.subr.mxu0 0.0
    %373 = vmatpush2.msra.mxu0 %v156
    %374 = vmatprep.subr.mxu0 0.0
    %375 = vmatpush2.msra.mxu0 %v155
    %376 = vmatprep.mubr.f32.mxu0 %v102
    %377 = vmatmul.mubr.f32.gmra.mxu0 %v101
    %v378 = vpop.f32.mrf.mxu0
    %v379 = vadd.f32 %v309, %v378
    %v380 = vpop.f32.mrf.mxu0
    %381 = vdwg.mxu0
    %382 = vmatprep.subr.mxu0 0.0
    %383 = vmatpush1.msra.mxu0 %v186
    %384 = vmatprep.subr.mxu0 0.0
    %385 = vmatpush1.msra.mxu0 %v185
    %386 = vmatprep.subr.mxu0 0.0
    %387 = vmatpush1.msra.mxu0 %v184
    %388 = vmatprep.subr.mxu0 0.0
    %389 = vmatpush1.msra.mxu0 %v183
    %390 = vmatprep.subr.mxu0 0.0
    %391 = vmatpush1.msra.mxu0 %v182
    %392 = vmatprep.subr.mxu0 0.0
    %393 = vmatpush1.msra.mxu0 %v181
    %394 = vmatprep.subr.mxu0 0.0
    %395 = vmatpush1.msra.mxu0 %v180
    %396 = vmatprep.subr.mxu0 0.0
    %397 = vmatpush1.msra.mxu0 %v179
    %398 = vmatprep.subr.mxu0 0.0
    %399 = vmatpush1.msra.mxu0 %v178
    %400 = vmatprep.subr.mxu0 0.0
    %401 = vmatpush1.msra.mxu0 %v177
    %402 = vmatprep.subr.mxu0 0.0
    %403 = vmatpush1.msra.mxu0 %v176
    %404 = vmatprep.subr.mxu0 0.0
    %405 = vmatpush1.msra.mxu0 %v175
    %406 = vmatprep.subr.mxu0 0.0
    %407 = vmatpush1.msra.mxu0 %v174
    %408 = vmatprep.subr.mxu0 0.0
    %409 = vmatpush1.msra.mxu0 %v173
    %410 = vmatprep.subr.mxu0 0.0
    %411 = vmatpush1.msra.mxu0 %v172
    %412 = vmatprep.subr.mxu0 0.0
    %413 = vmatpush1.msra.mxu0 %v171
    %414 = vmatprep.subr.mxu0 0.0
    %415 = vmatpush2.msra.mxu0 %v202
    %416 = vmatprep.subr.mxu0 0.0
    %417 = vmatpush2.msra.mxu0 %v201
    %418 = vmatprep.subr.mxu0 0.0
    %419 = vmatpush2.msra.mxu0 %v200
    %420 = vmatprep.subr.mxu0 0.0
    %421 = vmatpush2.msra.mxu0 %v199
    %422 = vmatprep.subr.mxu0 0.0
    %423 = vmatpush2.msra.mxu0 %v198
    %424 = vmatprep.subr.mxu0 0.0
    %425 = vmatpush2.msra.mxu0 %v197
    %426 = vmatprep.subr.mxu0 0.0
    %427 = vmatpush2.msra.mxu0 %v196
    %428 = vmatprep.subr.mxu0 0.0
    %429 = vmatpush2.msra.mxu0 %v195
    %430 = vmatprep.subr.mxu0 0.0
    %431 = vmatpush2.msra.mxu0 %v194
    %432 = vmatprep.subr.mxu0 0.0
    %433 = vmatpush2.msra.mxu0 %v193
    %434 = vmatprep.subr.mxu0 0.0
    %435 = vmatpush2.msra.mxu0 %v192
    %436 = vmatprep.subr.mxu0 0.0
    %437 = vmatpush2.msra.mxu0 %v191
    %438 = vmatprep.subr.mxu0 0.0
    %439 = vmatpush2.msra.mxu0 %v190
    %440 = vmatprep.subr.mxu0 0.0
    %441 = vmatpush2.msra.mxu0 %v189
    %442 = vmatprep.subr.mxu0 0.0
    %443 = vmatpush2.msra.mxu0 %v188
    %444 = vmatprep.subr.mxu0 0.0
    %445 = vmatpush2.msra.mxu0 %v187
    %446 = vmatprep.mubr.f32.mxu0 %v104
    %447 = vmatmul.mubr.f32.gmra.mxu0 %v103
    %v448 = vpop.f32.mrf.mxu0
    %v449 = vadd.f32 %v379, %v448
    %v450 = vpop.f32.mrf.mxu0
    %451 = vdwg.mxu0
    %452 = vmatprep.subr.mxu0 0.0
    %453 = vmatpush1.msra.mxu0 %v218
    %454 = vmatprep.subr.mxu0 0.0
    %455 = vmatpush1.msra.mxu0 %v217
    %456 = vmatprep.subr.mxu0 0.0
    %457 = vmatpush1.msra.mxu0 %v216
    %458 = vmatprep.subr.mxu0 0.0
    %459 = vmatpush1.msra.mxu0 %v215
    %460 = vmatprep.subr.mxu0 0.0
    %461 = vmatpush1.msra.mxu0 %v214
    %462 = vmatprep.subr.mxu0 0.0
    %463 = vmatpush1.msra.mxu0 %v213
    %464 = vmatprep.subr.mxu0 0.0
    %465 = vmatpush1.msra.mxu0 %v212
    %466 = vmatprep.subr.mxu0 0.0
    %467 = vmatpush1.msra.mxu0 %v211
    %468 = vmatprep.subr.mxu0 0.0
    %469 = vmatpush1.msra.mxu0 %v210
    %470 = vmatprep.subr.mxu0 0.0
    %471 = vmatpush1.msra.mxu0 %v209
    %472 = vmatprep.subr.mxu0 0.0
    %473 = vmatpush1.msra.mxu0 %v208
    %474 = vmatprep.subr.mxu0 0.0
    %475 = vmatpush1.msra.mxu0 %v207
    %476 = vmatprep.subr.mxu0 0.0
    %477 = vmatpush1.msra.mxu0 %v206
    %478 = vmatprep.subr.mxu0 0.0
    %479 = vmatpush1.msra.mxu0 %v205
    %480 = vmatprep.subr.mxu0 0.0
    %481 = vmatpush1.msra.mxu0 %v204
    %482 = vmatprep.subr.mxu0 0.0
    %483 = vmatpush1.msra.mxu0 %v203
    %484 = vmatprep.subr.mxu0 0.0
    %485 = vmatpush2.msra.mxu0 %v234
    %486 = vmatprep.subr.mxu0 0.0
    %487 = vmatpush2.msra.mxu0 %v233
    %488 = vmatprep.subr.mxu0 0.0
    %489 = vmatpush2.msra.mxu0 %v232
    %490 = vmatprep.subr.mxu0 0.0
    %491 = vmatpush2.msra.mxu0 %v231
    %492 = vmatprep.subr.mxu0 0.0
    %493 = vmatpush2.msra.mxu0 %v230
    %494 = vmatprep.subr.mxu0 0.0
    %495 = vmatpush2.msra.mxu0 %v229
    %496 = vmatprep.subr.mxu0 0.0
    %497 = vmatpush2.msra.mxu0 %v228
    %498 = vmatprep.subr.mxu0 0.0
    %499 = vmatpush2.msra.mxu0 %v227
    %500 = vmatprep.subr.mxu0 0.0
    %501 = vmatpush2.msra.mxu0 %v226
    %502 = vmatprep.subr.mxu0 0.0
    %503 = vmatpush2.msra.mxu0 %v225
    %504 = vmatprep.subr.mxu0 0.0
    %505 = vmatpush2.msra.mxu0 %v224
    %506 = vmatprep.subr.mxu0 0.0
    %507 = vmatpush2.msra.mxu0 %v223
    %508 = vmatprep.subr.mxu0 0.0
    %509 = vmatpush2.msra.mxu0 %v222
    %510 = vmatprep.subr.mxu0 0.0
    %511 = vmatpush2.msra.mxu0 %v221
    %512 = vmatprep.subr.mxu0 0.0
    %513 = vmatpush2.msra.mxu0 %v220
    %514 = vmatprep.subr.mxu0 0.0
    %515 = vmatpush2.msra.mxu0 %v219
    %516 = vmatprep.mubr.f32.mxu0 %v106
    %517 = vmatmul.mubr.f32.gmra.mxu0 %v105
    %v518 = vpop.f32.mrf.mxu0
    %v519 = vadd.f32 %v449, %v518
    %v520 = vpop.f32.mrf.mxu0
    %521 = vdwg.mxu0
    %v522 = vmax.f32 %v519, 0.0
    %v523 = vld [vmem:[#allocation7] sm:$0xff]
    %v524 = vld [vmem:[#allocation7 + $0x8] sm:$0xff]
    %v525 = vld [vmem:[#allocation7 + $0x10] sm:$0xff]
    %v526 = vld [vmem:[#allocation7 + $0x18] sm:$0xff]
    %v527 = vld [vmem:[#allocation7 + $0x20] sm:$0xff]
    %v528 = vld [vmem:[#allocation7 + $0x28] sm:$0xff]
    %v529 = vld [vmem:[#allocation7 + $0x30] sm:$0xff]
    %v530 = vld [vmem:[#allocation7 + $0x38] sm:$0xff]
    %v531 = vld [vmem:[#allocation7 + $0x40] sm:$0xff]
    %v532 = vld [vmem:[#allocation7 + $0x48] sm:$0xff]
    %v533 = vld [vmem:[#allocation7 + $0x50] sm:$0xff]
    %v534 = vld [vmem:[#allocation7 + $0x58] sm:$0xff]
    %v535 = vld [vmem:[#allocation7 + $0x60] sm:$0xff]
    %v536 = vld [vmem:[#allocation7 + $0x68] sm:$0xff]
    %v537 = vld [vmem:[#allocation7 + $0x70] sm:$0xff]
    %v538 = vld [vmem:[#allocation7 + $0x78] sm:$0xff]
    %v539 = vld [vmem:[%s4] sm:$0x1]
    %v541 = vlaneseq
    %v542 = vshrl.u32 %v541, 7
    %v543 = vsub.s32 0, %v542
    %v544 = vrot.slane %v539, %v543
    %546 = vmatprep.subr.mxu0 0.0
    %547 = vmatpush1.msra.mxu0 %v538
    %548 = vmatprep.subr.mxu0 0.0
    %549 = vmatpush1.msra.mxu0 %v537
    %550 = vmatprep.subr.mxu0 0.0
    %551 = vmatpush1.msra.mxu0 %v536
    %552 = vmatprep.subr.mxu0 0.0
    %553 = vmatpush1.msra.mxu0 %v535
    %554 = vmatprep.subr.mxu0 0.0
    %555 = vmatpush1.msra.mxu0 %v534
    %556 = vmatprep.subr.mxu0 0.0
    %557 = vmatpush1.msra.mxu0 %v533
    %558 = vmatprep.subr.mxu0 0.0
    %559 = vmatpush1.msra.mxu0 %v532
    %560 = vmatprep.subr.mxu0 0.0
    %561 = vmatpush1.msra.mxu0 %v531
    %562 = vmatprep.subr.mxu0 0.0
    %563 = vmatpush1.msra.mxu0 %v530
    %564 = vmatprep.subr.mxu0 0.0
    %565 = vmatpush1.msra.mxu0 %v529
    %566 = vmatprep.subr.mxu0 0.0
    %567 = vmatpush1.msra.mxu0 %v528
    %568 = vmatprep.subr.mxu0 0.0
    %569 = vmatpush1.msra.mxu0 %v527
    %570 = vmatprep.subr.mxu0 0.0
    %571 = vmatpush1.msra.mxu0 %v526
    %572 = vmatprep.subr.mxu0 0.0
    %573 = vmatpush1.msra.mxu0 %v525
    %574 = vmatprep.subr.mxu0 0.0
    %575 = vmatpush1.msra.mxu0 %v524
    %576 = vmatprep.subr.mxu0 0.0
    %577 = vmatpush1.msra.mxu0 %v523
    %578 = vmatprep.subr.mxu0 0.0
    %579 = vmatpush2.msra.mxu0 0.0
    %580 = vmatprep.subr.mxu0 0.0
    %581 = vmatpush2.msra.mxu0 0.0
    %582 = vmatprep.subr.mxu0 0.0
    %583 = vmatpush2.msra.mxu0 0.0
    %584 = vmatprep.subr.mxu0 0.0
    %585 = vmatpush2.msra.mxu0 0.0
    %586 = vmatprep.subr.mxu0 0.0
    %587 = vmatpush2.msra.mxu0 0.0
    %588 = vmatprep.subr.mxu0 0.0
    %589 = vmatpush2.msra.mxu0 0.0
    %590 = vmatprep.subr.mxu0 0.0
    %591 = vmatpush2.msra.mxu0 0.0
    %592 = vmatprep.subr.mxu0 0.0
    %593 = vmatpush2.msra.mxu0 0.0
    %594 = vmatprep.subr.mxu0 0.0
    %595 = vmatpush2.msra.mxu0 0.0
    %596 = vmatprep.subr.mxu0 0.0
    %597 = vmatpush2.msra.mxu0 0.0
    %598 = vmatprep.subr.mxu0 0.0
    %599 = vmatpush2.msra.mxu0 0.0
    %600 = vmatprep.subr.mxu0 0.0
    %601 = vmatpush2.msra.mxu0 0.0
    %602 = vmatprep.subr.mxu0 0.0
    %603 = vmatpush2.msra.mxu0 0.0
    %604 = vmatprep.subr.mxu0 0.0
    %605 = vmatpush2.msra.mxu0 0.0
    %606 = vmatprep.subr.mxu0 0.0
    %607 = vmatpush2.msra.mxu0 0.0
    %608 = vmatprep.subr.mxu0 0.0
    %609 = vmatpush2.msra.mxu0 0.0
    %610 = vmatprep.mubr.f32.mxu0 0.0
    %611 = vmatmul.mubr.f32.gmra.mxu0 %v522
    %v612 = vpop.f32.mrf.mxu0
    %v613 = vadd.f32 %v544, %v612
    %v614 = vpop.f32.mrf.mxu0
    %615 = vdwg.mxu0
    %v616 = vmax.f32 %v613, 0.0
    %v617 = vld [vmem:[#allocation8] sm:$0xff]
    %v618 = vld [vmem:[#allocation8 + $0x8] sm:$0xff]
    %v619 = vld [vmem:[#allocation8 + $0x10] sm:$0xff]
    %v620 = vld [vmem:[#allocation8 + $0x18] sm:$0xff]
    %v621 = vld [vmem:[#allocation8 + $0x20] sm:$0xff]
    %v622 = vld [vmem:[#allocation8 + $0x28] sm:$0xff]
    %v623 = vld [vmem:[#allocation8 + $0x30] sm:$0xff]
    %v624 = vld [vmem:[#allocation8 + $0x38] sm:$0xff]
    %v625 = vld [vmem:[#allocation8 + $0x40] sm:$0xff]
    %v626 = vld [vmem:[#allocation8 + $0x48] sm:$0xff]
    %v627 = vld [vmem:[#allocation8 + $0x50] sm:$0xff]
    %v628 = vld [vmem:[#allocation8 + $0x58] sm:$0xff]
    %v629 = vld [vmem:[#allocation8 + $0x60] sm:$0xff]
    %v630 = vld [vmem:[#allocation8 + $0x68] sm:$0xff]
    %v631 = vld [vmem:[#allocation8 + $0x70] sm:$0xff]
    %v632 = vld [vmem:[#allocation8 + $0x78] sm:$0xff]
    %v633 = vld [vmem:[%s6] sm:$0x1]
    %v635 = vlaneseq
    %v636 = vshrl.u32 %v635, 7
    %v637 = vsub.s32 0, %v636
    %v638 = vrot.slane %v633, %v637
    %640 = vmatprep.subr.mxu0 0.0
    %641 = vmatpush1.msra.mxu0 %v632
    %642 = vmatprep.subr.mxu0 0.0
    %643 = vmatpush1.msra.mxu0 %v631
    %644 = vmatprep.subr.mxu0 0.0
    %645 = vmatpush1.msra.mxu0 %v630
    %646 = vmatprep.subr.mxu0 0.0
    %647 = vmatpush1.msra.mxu0 %v629
    %648 = vmatprep.subr.mxu0 0.0
    %649 = vmatpush1.msra.mxu0 %v628
    %650 = vmatprep.subr.mxu0 0.0
    %651 = vmatpush1.msra.mxu0 %v627
    %652 = vmatprep.subr.mxu0 0.0
    %653 = vmatpush1.msra.mxu0 %v626
    %654 = vmatprep.subr.mxu0 0.0
    %655 = vmatpush1.msra.mxu0 %v625
    %656 = vmatprep.subr.mxu0 0.0
    %657 = vmatpush1.msra.mxu0 %v624
    %658 = vmatprep.subr.mxu0 0.0
    %659 = vmatpush1.msra.mxu0 %v623
    %660 = vmatprep.subr.mxu0 0.0
    %661 = vmatpush1.msra.mxu0 %v622
    %662 = vmatprep.subr.mxu0 0.0
    %663 = vmatpush1.msra.mxu0 %v621
    %664 = vmatprep.subr.mxu0 0.0
    %665 = vmatpush1.msra.mxu0 %v620
    %666 = vmatprep.subr.mxu0 0.0
    %667 = vmatpush1.msra.mxu0 %v619
    %668 = vmatprep.subr.mxu0 0.0
    %669 = vmatpush1.msra.mxu0 %v618
    %670 = vmatprep.subr.mxu0 0.0
    %671 = vmatpush1.msra.mxu0 %v617
    %672 = vmatprep.subr.mxu0 0.0
    %673 = vmatpush2.msra.mxu0 0.0
    %674 = vmatprep.subr.mxu0 0.0
    %675 = vmatpush2.msra.mxu0 0.0
    %676 = vmatprep.subr.mxu0 0.0
    %677 = vmatpush2.msra.mxu0 0.0
    %678 = vmatprep.subr.mxu0 0.0
    %679 = vmatpush2.msra.mxu0 0.0
    %680 = vmatprep.subr.mxu0 0.0
    %681 = vmatpush2.msra.mxu0 0.0
    %682 = vmatprep.subr.mxu0 0.0
    %683 = vmatpush2.msra.mxu0 0.0
    %684 = vmatprep.subr.mxu0 0.0
    %685 = vmatpush2.msra.mxu0 0.0
    %686 = vmatprep.subr.mxu0 0.0
    %687 = vmatpush2.msra.mxu0 0.0
    %688 = vmatprep.subr.mxu0 0.0
    %689 = vmatpush2.msra.mxu0 0.0
    %690 = vmatprep.subr.mxu0 0.0
    %691 = vmatpush2.msra.mxu0 0.0
    %692 = vmatprep.subr.mxu0 0.0
    %693 = vmatpush2.msra.mxu0 0.0
    %694 = vmatprep.subr.mxu0 0.0
    %695 = vmatpush2.msra.mxu0 0.0
    %696 = vmatprep.subr.mxu0 0.0
    %697 = vmatpush2.msra.mxu0 0.0
    %698 = vmatprep.subr.mxu0 0.0
    %699 = vmatpush2.msra.mxu0 0.0
    %700 = vmatprep.subr.mxu0 0.0
    %701 = vmatpush2.msra.mxu0 0.0
    %702 = vmatprep.subr.mxu0 0.0
    %703 = vmatpush2.msra.mxu0 0.0
    %704 = vmatprep.mubr.f32.mxu0 0.0
    %705 = vmatmul.mubr.f32.gmra.mxu0 %v616
    %v706 = vpop.f32.mrf.mxu0
    %v707 = vadd.f32 %v638, %v706
    %v708 = vpop.f32.mrf.mxu0
    %709 = vdwg.mxu0
    %v710 = vmax.f32 %v707, 0.0
    %v711 = vld [vmem:[#allocation10] sm:$0xff]
    %v712 = vld [vmem:[#allocation10 + $0x8] sm:$0xff]
    %v713 = vld [vmem:[#allocation10 + $0x10] sm:$0xff]
    %v714 = vld [vmem:[#allocation10 + $0x18] sm:$0xff]
    %v715 = vld [vmem:[#allocation10 + $0x20] sm:$0xff]
    %v716 = vld [vmem:[#allocation10 + $0x28] sm:$0xff]
    %v717 = vld [vmem:[#allocation10 + $0x30] sm:$0xff]
    %v718 = vld [vmem:[#allocation10 + $0x38] sm:$0xff]
    %v719 = vld [vmem:[#allocation10 + $0x40] sm:$0xff]
    %v720 = vld [vmem:[#allocation10 + $0x48] sm:$0xff]
    %v721 = vld [vmem:[#allocation10 + $0x50] sm:$0xff]
    %v722 = vld [vmem:[#allocation10 + $0x58] sm:$0xff]
    %v723 = vld [vmem:[#allocation10 + $0x60] sm:$0xff]
    %v724 = vld [vmem:[#allocation10 + $0x68] sm:$0xff]
    %v725 = vld [vmem:[#allocation10 + $0x70] sm:$0xff]
    %v726 = vld [vmem:[#allocation10 + $0x78] sm:$0xff]
    %v727 = vld [vmem:[%s8] sm:$0x1]
    %v729 = vlaneseq
    %v730 = vshrl.u32 %v729, 7
    %v731 = vsub.s32 0, %v730
    %v732 = vrot.slane %v727, %v731
    %734 = vmatprep.subr.mxu0 0.0
    %735 = vmatpush1.msra.mxu0 %v726
    %736 = vmatprep.subr.mxu0 0.0
    %737 = vmatpush1.msra.mxu0 %v725
    %738 = vmatprep.subr.mxu0 0.0
    %739 = vmatpush1.msra.mxu0 %v724
    %740 = vmatprep.subr.mxu0 0.0
    %741 = vmatpush1.msra.mxu0 %v723
    %742 = vmatprep.subr.mxu0 0.0
    %743 = vmatpush1.msra.mxu0 %v722
    %744 = vmatprep.subr.mxu0 0.0
    %745 = vmatpush1.msra.mxu0 %v721
    %746 = vmatprep.subr.mxu0 0.0
    %747 = vmatpush1.msra.mxu0 %v720
    %748 = vmatprep.subr.mxu0 0.0
    %749 = vmatpush1.msra.mxu0 %v719
    %750 = vmatprep.subr.mxu0 0.0
    %751 = vmatpush1.msra.mxu0 %v718
    %752 = vmatprep.subr.mxu0 0.0
    %753 = vmatpush1.msra.mxu0 %v717
    %754 = vmatprep.subr.mxu0 0.0
    %755 = vmatpush1.msra.mxu0 %v716
    %756 = vmatprep.subr.mxu0 0.0
    %757 = vmatpush1.msra.mxu0 %v715
    %758 = vmatprep.subr.mxu0 0.0
    %759 = vmatpush1.msra.mxu0 %v714
    %760 = vmatprep.subr.mxu0 0.0
    %761 = vmatpush1.msra.mxu0 %v713
    %762 = vmatprep.subr.mxu0 0.0
    %763 = vmatpush1.msra.mxu0 %v712
    %764 = vmatprep.subr.mxu0 0.0
    %765 = vmatpush1.msra.mxu0 %v711
    %766 = vmatprep.subr.mxu0 0.0
    %767 = vmatpush2.msra.mxu0 0.0
    %768 = vmatprep.subr.mxu0 0.0
    %769 = vmatpush2.msra.mxu0 0.0
    %770 = vmatprep.subr.mxu0 0.0
    %771 = vmatpush2.msra.mxu0 0.0
    %772 = vmatprep.subr.mxu0 0.0
    %773 = vmatpush2.msra.mxu0 0.0
    %774 = vmatprep.subr.mxu0 0.0
    %775 = vmatpush2.msra.mxu0 0.0
    %776 = vmatprep.subr.mxu0 0.0
    %777 = vmatpush2.msra.mxu0 0.0
    %778 = vmatprep.subr.mxu0 0.0
    %779 = vmatpush2.msra.mxu0 0.0
    %780 = vmatprep.subr.mxu0 0.0
    %781 = vmatpush2.msra.mxu0 0.0
    %782 = vmatprep.subr.mxu0 0.0
    %783 = vmatpush2.msra.mxu0 0.0
    %784 = vmatprep.subr.mxu0 0.0
    %785 = vmatpush2.msra.mxu0 0.0
    %786 = vmatprep.subr.mxu0 0.0
    %787 = vmatpush2.msra.mxu0 0.0
    %788 = vmatprep.subr.mxu0 0.0
    %789 = vmatpush2.msra.mxu0 0.0
    %790 = vmatprep.subr.mxu0 0.0
    %791 = vmatpush2.msra.mxu0 0.0
    %792 = vmatprep.subr.mxu0 0.0
    %793 = vmatpush2.msra.mxu0 0.0
    %794 = vmatprep.subr.mxu0 0.0
    %795 = vmatpush2.msra.mxu0 0.0
    %796 = vmatprep.subr.mxu0 0.0
    %797 = vmatpush2.msra.mxu0 0.0
    %798 = vmatprep.mubr.f32.mxu0 0.0
    %799 = vmatmul.mubr.f32.gmra.mxu0 %v710
    %v800 = vpop.f32.mrf.mxu0
    %v801 = vadd.f32 %v732, %v800
    %v802 = vpop.f32.mrf.mxu0
    %803 = vdwg.mxu0
    %804 = vst [vmem:[#allocation11] sm:$0xff] %v801
    // Predicated region
    $region58: #{tpu_custom_call.1} parent=1 // pred_check
      _
    $region59: #{tpu_custom_call.1} parent=1 // pred_check_branch
      %806 = sbr.rel (0) target = $region61
    $region60: #{tpu_custom_call.1} parent=1 // pred_region
      %s808 = ssub.s32 128, 128
      %809 = vsyncadd [#allocation4], %s808
      %s811 = sshll.u32 [#allocation11], 4
      %s812 = int_to_ptr.vmem [resolvable:$true] %s811
      %814 = dma.vmem_to_hbm [thread:$0]  %s812, 128, %s9, [#allocation4]
    $region61: #{tpu_custom_call.1} parent=1 // pred_fallthru
      _
    // Predicated region
    $region62: #{tpu_custom_call.1} parent=1 // pred_check
      _
    $region63: #{tpu_custom_call.1} parent=1 // pred_check_branch
      %816 = sbr.rel (0) target = $region65
    $region64: #{tpu_custom_call.1} parent=1 // pred_region
      %817 = dma.done [#allocation4], 128
    $region65: #{tpu_custom_call.1} parent=1 // pred_fallthru
      _
    %818 = vsyncpa [#allocation3], 1
    %819 = vsyncpa [#allocation6], 1
    %820 = vsyncpa [#allocation9], 1
    %821 = vsyncpa [#allocation4], 1

// kernel: tpu_custom_call.1
$region0: #{tpu_custom_call.1}
  #allocation0 [shape = 'u32[]', space=smem, size = 0x4, offset = 0x4, fixed_abs, tag = 'smem constant byte address 0x4 - core index']
  #allocation1 [shape = 'u32[144,128]{1,0:T(1,128)}', space=vmem, size = 0x12000, scoped, tag = 'internal scratch']
  %s0 = inlined_call_operand.hbm [shape: f32[8,1024], index: 0, kind: input, shape index: {}]
  %s1 = inlined_call_operand.hbm [shape: f32[1024,128], index: 1, kind: input, shape index: {}]
  %s2 = inlined_call_operand.vmem [shape: f32[1,128], index: 2, kind: input, shape index: {}]
  %s3 = inlined_call_operand.hbm [shape: f32[128,128], index: 3, kind: input, shape index: {}]
  %s4 = inlined_call_operand.vmem [shape: f32[1,128], index: 4, kind: input, shape index: {}]
  %s5 = inlined_call_operand.hbm [shape: f32[128,128], index: 5, kind: input, shape index: {}]
  %s6 = inlined_call_operand.vmem [shape: f32[1,128], index: 6, kind: input, shape index: {}]
  %s7 = inlined_call_operand.hbm [shape: f32[128,128], index: 7, kind: input, shape index: {}]
  %s8 = inlined_call_operand.vmem [shape: f32[1,128], index: 8, kind: input, shape index: {}]
  %s9 = inlined_call_operand.hbm [shape: f32[8,128], index: 9, kind: output, shape index: {}]
  %s10 = sld [smem:[#allocation0]]
  $region66: #{tpu_custom_call.1} parent=0
    _
  %s12 = ssub.s32 1, %s10
  %s13 = scalar_select 0, %s12, %s10
  $region1: #{tpu_custom_call.1} parent=0
    #allocation2 [shape = 'u8[32768]{0}', space=vmem, size = 0x8000, scoped, tag = 'input window, operand 0, single buffered']
    #allocation3 [shape = 's32[1]{0}', space=sflag, size = 0x4, scoped, tag = 'scoped memory for tpu_custom_call.1']
    #allocation4 [shape = 's32[1]{0}', space=sflag, size = 0x4, scoped, tag = 'scoped memory for tpu_custom_call.1']
    #allocation5 [shape = 'u8[524288]{0}', space=vmem, size = 0x80000, scoped, tag = 'input window, operand 1, single buffered']
    #allocation6 [shape = 's32[1]{0}', space=sflag, size = 0x4, scoped, tag = 'scoped memory for tpu_custom_call.1']
    #allocation7 [shape = 'u8[65536]{0}', space=vmem, size = 0x10000, scoped, tag = 'input window, operand 3, single buffered']
    #allocation8 [shape = 'u8[65536]{0}', space=vmem, size = 0x10000, scoped, tag = 'input window, operand 5, single buffered']
    #allocation9 [shape = 's32[1]{0}', space=sflag, size = 0x4, scoped, tag = 'scoped memory for tpu_custom_call.1']
    #allocation10 [shape = 'u8[65536]{0}', space=vmem, size = 0x10000, scoped, tag = 'input window, operand 7, single buffered']
    #allocation11 [shape = 'u8[4096]{0}', space=vmem, size = 0x1000, scoped, tag = 'output window, operand 0, single buffered']
    %14 = vsyncpa [#allocation3], 0
    %15 = vsyncpa [#allocation6], 0
    %16 = vsyncpa [#allocation9], 0
    %17 = vsyncpa [#allocation4], 0
    // Predicated region
    $region2: #{tpu_custom_call.1} parent=1 // pred_check
      _
    $region3: #{tpu_custom_call.1} parent=1 // pred_check_branch
      %19 = sbr.rel (0) target = $region5
    $region4: #{tpu_custom_call.1} parent=1 // pred_region
      %s21 = ssub.s32 1024, 1024
      %22 = vsyncadd [#allocation3], %s21
      %s24 = sshll.u32 [#allocation2], 4
      %s25 = int_to_ptr.vmem [resolvable:$true] %s24
      %27 = dma.hbm_to_vmem [thread:$0]  %s0, 1024, %s25, [#allocation3]
    $region5: #{tpu_custom_call.1} parent=1 // pred_fallthru
      _
    // Predicated region
    $region6: #{tpu_custom_call.1} parent=1 // pred_check
      _
    $region7: #{tpu_custom_call.1} parent=1 // pred_check_branch
      %29 = sbr.rel (0) target = $region9
    $region8: #{tpu_custom_call.1} parent=1 // pred_region
      %s31 = ssub.s32 16384, 16384
      %32 = vsyncadd [#allocation6], %s31
      %s33 = sshll.u32 [#allocation5], 4
      %s34 = int_to_ptr.vmem [resolvable:$true] %s33
      %39 = dma.hbm_to_vmem [thread:$0]  %s1, 16384, %s34, [#allocation6], 128, 128, 8
    $region9: #{tpu_custom_call.1} parent=1 // pred_fallthru
      _
    // Predicated region
    $region10: #{tpu_custom_call.1} parent=1 // pred_check
      _
    $region11: #{tpu_custom_call.1} parent=1 // pred_check_branch
      %41 = sbr.rel (0) target = $region13
    $region12: #{tpu_custom_call.1} parent=1 // pred_region
      _
    $region13: #{tpu_custom_call.1} parent=1 // pred_fallthru
      _
    // Predicated region
    $region14: #{tpu_custom_call.1} parent=1 // pred_check
      _
    $region15: #{tpu_custom_call.1} parent=1 // pred_check_branch
      %43 = sbr.rel (0) target = $region17
    $region16: #{tpu_custom_call.1} parent=1 // pred_region
      %s45 = ssub.s32 2048, 2048
      %46 = vsyncadd [#allocation6], %s45
      %s47 = sshll.u32 [#allocation7], 4
      %s48 = int_to_ptr.vmem [resolvable:$true] %s47
      %53 = dma.hbm_to_vmem [thread:$0]  %s3, 2048, %s48, [#allocation6], 128, 128, 8
    $region17: #{tpu_custom_call.1} parent=1 // pred_fallthru
      _
    // Predicated region
    $region18: #{tpu_custom_call.1} parent=1 // pred_check
      _
    $region19: #{tpu_custom_call.1} parent=1 // pred_check_branch
      %55 = sbr.rel (0) target = $region21
    $region20: #{tpu_custom_call.1} parent=1 // pred_region
      _
    $region21: #{tpu_custom_call.1} parent=1 // pred_fallthru
      _
    // Predicated region
    $region22: #{tpu_custom_call.1} parent=1 // pred_check
      _
    $region23: #{tpu_custom_call.1} parent=1 // pred_check_branch
      %57 = sbr.rel (0) target = $region25
    $region24: #{tpu_custom_call.1} parent=1 // pred_region
      %s59 = ssub.s32 2048, 2048
      %60 = vsyncadd [#allocation9], %s59
      %s61 = sshll.u32 [#allocation8], 4
      %s62 = int_to_ptr.vmem [resolvable:$true] %s61
      %67 = dma.hbm_to_vmem [thread:$0]  %s5, 2048, %s62, [#allocation9], 128, 128, 8
    $region25: #{tpu_custom_call.1} parent=1 // pred_fallthru
      _
    // Predicated region
    $region26: #{tpu_custom_call.1} parent=1 // pred_check
      _
    $region27: #{tpu_custom_call.1} parent=1 // pred_check_branch
      %69 = sbr.rel (0) target = $region29
    $region28: #{tpu_custom_call.1} parent=1 // pred_region
      _
    $region29: #{tpu_custom_call.1} parent=1 // pred_fallthru
      _
    // Predicated region
    $region30: #{tpu_custom_call.1} parent=1 // pred_check
      _
    $region31: #{tpu_custom_call.1} parent=1 // pred_check_branch
      %71 = sbr.rel (0) target = $region33
    $region32: #{tpu_custom_call.1} parent=1 // pred_region
      %s73 = ssub.s32 2048, 2048
      %74 = vsyncadd [#allocation9], %s73
      %s75 = sshll.u32 [#allocation10], 4
      %s76 = int_to_ptr.vmem [resolvable:$true] %s75
      %81 = dma.hbm_to_vmem [thread:$0]  %s7, 2048, %s76, [#allocation9], 128, 128, 8
    $region33: #{tpu_custom_call.1} parent=1 // pred_fallthru
      _
    // Predicated region
    $region34: #{tpu_custom_call.1} parent=1 // pred_check
      _
    $region35: #{tpu_custom_call.1} parent=1 // pred_check_branch
      %83 = sbr.rel (0) target = $region37
    $region36: #{tpu_custom_call.1} parent=1 // pred_region
      _
    $region37: #{tpu_custom_call.1} parent=1 // pred_fallthru
      _
    // Predicated region
    $region38: #{tpu_custom_call.1} parent=1 // pred_check
      _
    $region39: #{tpu_custom_call.1} parent=1 // pred_check_branch
      %85 = sbr.rel (0) target = $region41
    $region40: #{tpu_custom_call.1} parent=1 // pred_region
      %86 = dma.done [#allocation3], 1024
    $region41: #{tpu_custom_call.1} parent=1 // pred_fallthru
      _
    // Predicated region
    $region42: #{tpu_custom_call.1} parent=1 // pred_check
      _
    $region43: #{tpu_custom_call.1} parent=1 // pred_check_branch
      %88 = sbr.rel (0) target = $region45
    $region44: #{tpu_custom_call.1} parent=1 // pred_region
      %89 = dma.done [#allocation6], 16384
    $region45: #{tpu_custom_call.1} parent=1 // pred_fallthru
      _
    // Predicated region
    $region46: #{tpu_custom_call.1} parent=1 // pred_check
      _
    $region47: #{tpu_custom_call.1} parent=1 // pred_check_branch
      %91 = sbr.rel (0) target = $region49
    $region48: #{tpu_custom_call.1} parent=1 // pred_region
      %92 = dma.done [#allocation6], 2048
    $region49: #{tpu_custom_call.1} parent=1 // pred_fallthru
      _
    // Predicated region
    $region50: #{tpu_custom_call.1} parent=1 // pred_check
      _
    $region51: #{tpu_custom_call.1} parent=1 // pred_check_branch
      %94 = sbr.rel (0) target = $region53
    $region52: #{tpu_custom_call.1} parent=1 // pred_region
      %95 = dma.done [#allocation9], 2048
    $region53: #{tpu_custom_call.1} parent=1 // pred_fallthru
      _
    // Predicated region
    $region54: #{tpu_custom_call.1} parent=1 // pred_check
      _
    $region55: #{tpu_custom_call.1} parent=1 // pred_check_branch
      %97 = sbr.rel (0) target = $region57
    $region56: #{tpu_custom_call.1} parent=1 // pred_region
      %98 = dma.done [#allocation9], 2048
    $region57: #{tpu_custom_call.1} parent=1 // pred_fallthru
      _
    %v99 = vld [vmem:[#allocation2] sm:$0xff]
    %v100 = vld [vmem:[#allocation2 + $0x8] sm:$0xff]
    %v101 = vld [vmem:[#allocation2 + $0x10] sm:$0xff]
    %v102 = vld [vmem:[#allocation2 + $0x18] sm:$0xff]
    %v103 = vld [vmem:[#allocation2 + $0x20] sm:$0xff]
    %v104 = vld [vmem:[#allocation2 + $0x28] sm:$0xff]
    %v105 = vld [vmem:[#allocation2 + $0x30] sm:$0xff]
    %v106 = vld [vmem:[#allocation2 + $0x38] sm:$0xff]
    %v107 = vld [vmem:[#allocation5] sm:$0xff]
    %v108 = vld [vmem:[#allocation5 + $0x8] sm:$0xff]
    %v109 = vld [vmem:[#allocation5 + $0x10] sm:$0xff]
    %v110 = vld [vmem:[#allocation5 + $0x18] sm:$0xff]
    %v111 = vld [vmem:[#allocation5 + $0x20] sm:$0xff]
    %v112 = vld [vmem:[#allocation5 + $0x28] sm:$0xff]
    %v113 = vld [vmem:[#allocation5 + $0x30] sm:$0xff]
    %v114 = vld [vmem:[#allocation5 + $0x38] sm:$0xff]
    %v115 = vld [vmem:[#allocation5 + $0x40] sm:$0xff]
    %v116 = vld [vmem:[#allocation5 + $0x48] sm:$0xff]
    %v117 = vld [vmem:[#allocation5 + $0x50] sm:$0xff]
    %v118 = vld [vmem:[#allocation5 + $0x58] sm:$0xff]
    %v119 = vld [vmem:[#allocation5 + $0x60] sm:$0xff]
    %v120 = vld [vmem:[#allocation5 + $0x68] sm:$0xff]
    %v121 = vld [vmem:[#allocation5 + $0x70] sm:$0xff]
    %v122 = vld [vmem:[#allocation5 + $0x78] sm:$0xff]
    %v123 = vld [vmem:[#allocation5 + $0x80] sm:$0xff]
    %v124 = vld [vmem:[#allocation5 + $0x88] sm:$0xff]
    %v125 = vld [vmem:[#allocation5 + $0x90] sm:$0xff]
    %v126 = vld [vmem:[#allocation5 + $0x98] sm:$0xff]
    %v127 = vld [vmem:[#allocation5 + $0xa0] sm:$0xff]
    %v128 = vld [vmem:[#allocation5 + $0xa8] sm:$0xff]
    %v129 = vld [vmem:[#allocation5 + $0xb0] sm:$0xff]
    %v130 = vld [vmem:[#allocation5 + $0xb8] sm:$0xff]
    %v131 = vld [vmem:[#allocation5 + $0xc0] sm:$0xff]
    %v132 = vld [vmem:[#allocation5 + $0xc8] sm:$0xff]
    %v133 = vld [vmem:[#allocation5 + $0xd0] sm:$0xff]
    %v134 = vld [vmem:[#allocation5 + $0xd8] sm:$0xff]
    %v135 = vld [vmem:[#allocation5 + $0xe0] sm:$0xff]
    %v136 = vld [vmem:[#allocation5 + $0xe8] sm:$0xff]
    %v137 = vld [vmem:[#allocation5 + $0xf0] sm:$0xff]
    %v138 = vld [vmem:[#allocation5 + $0xf8] sm:$0xff]
    %v139 = vld [vmem:[#allocation5 + $0x100] sm:$0xff]
    %v140 = vld [vmem:[#allocation5 + $0x108] sm:$0xff]
    %v141 = vld [vmem:[#allocation5 + $0x110] sm:$0xff]
    %v142 = vld [vmem:[#allocation5 + $0x118] sm:$0xff]
    %v143 = vld [vmem:[#allocation5 + $0x120] sm:$0xff]
    %v144 = vld [vmem:[#allocation5 + $0x128] sm:$0xff]
    %v145 = vld [vmem:[#allocation5 + $0x130] sm:$0xff]
    %v146 = vld [vmem:[#allocation5 + $0x138] sm:$0xff]
    %v147 = vld [vmem:[#allocation5 + $0x140] sm:$0xff]
    %v148 = vld [vmem:[#allocation5 + $0x148] sm:$0xff]
    %v149 = vld [vmem:[#allocation5 + $0x150] sm:$0xff]
    %v150 = vld [vmem:[#allocation5 + $0x158] sm:$0xff]
    %v151 = vld [vmem:[#allocation5 + $0x160] sm:$0xff]
    %v152 = vld [vmem:[#allocation5 + $0x168] sm:$0xff]
    %v153 = vld [vmem:[#allocation5 + $0x170] sm:$0xff]
    %v154 = vld [vmem:[#allocation5 + $0x178] sm:$0xff]
    %v155 = vld [vmem:[#allocation5 + $0x180] sm:$0xff]
    %v156 = vld [vmem:[#allocation5 + $0x188] sm:$0xff]
    %v157 = vld [vmem:[#allocation5 + $0x190] sm:$0xff]
    %v158 = vld [vmem:[#allocation5 + $0x198] sm:$0xff]
    %v159 = vld [vmem:[#allocation5 + $0x1a0] sm:$0xff]
    %v160 = vld [vmem:[#allocation5 + $0x1a8] sm:$0xff]
    %v161 = vld [vmem:[#allocation5 + $0x1b0] sm:$0xff]
    %v162 = vld [vmem:[#allocation5 + $0x1b8] sm:$0xff]
    %v163 = vld [vmem:[#allocation5 + $0x1c0] sm:$0xff]
    %v164 = vld [vmem:[#allocation5 + $0x1c8] sm:$0xff]
    %v165 = vld [vmem:[#allocation5 + $0x1d0] sm:$0xff]
    %v166 = vld [vmem:[#allocation5 + $0x1d8] sm:$0xff]
    %v167 = vld [vmem:[#allocation5 + $0x1e0] sm:$0xff]
    %v168 = vld [vmem:[#allocation5 + $0x1e8] sm:$0xff]
    %v169 = vld [vmem:[#allocation5 + $0x1f0] sm:$0xff]
    %v170 = vld [vmem:[#allocation5 + $0x1f8] sm:$0xff]
    %v171 = vld [vmem:[#allocation5 + $0x200] sm:$0xff]
    %v172 = vld [vmem:[#allocation5 + $0x208] sm:$0xff]
    %v173 = vld [vmem:[#allocation5 + $0x210] sm:$0xff]
    %v174 = vld [vmem:[#allocation5 + $0x218] sm:$0xff]
    %v175 = vld [vmem:[#allocation5 + $0x220] sm:$0xff]
    %v176 = vld [vmem:[#allocation5 + $0x228] sm:$0xff]
    %v177 = vld [vmem:[#allocation5 + $0x230] sm:$0xff]
    %v178 = vld [vmem:[#allocation5 + $0x238] sm:$0xff]
    %v179 = vld [vmem:[#allocation5 + $0x240] sm:$0xff]
    %v180 = vld [vmem:[#allocation5 + $0x248] sm:$0xff]
    %v181 = vld [vmem:[#allocation5 + $0x250] sm:$0xff]
    %v182 = vld [vmem:[#allocation5 + $0x258] sm:$0xff]
    %v183 = vld [vmem:[#allocation5 + $0x260] sm:$0xff]
    %v184 = vld [vmem:[#allocation5 + $0x268] sm:$0xff]
    %v185 = vld [vmem:[#allocation5 + $0x270] sm:$0xff]
    %v186 = vld [vmem:[#allocation5 + $0x278] sm:$0xff]
    %v187 = vld [vmem:[#allocation5 + $0x280] sm:$0xff]
    %v188 = vld [vmem:[#allocation5 + $0x288] sm:$0xff]
    %v189 = vld [vmem:[#allocation5 + $0x290] sm:$0xff]
    %v190 = vld [vmem:[#allocation5 + $0x298] sm:$0xff]
    %v191 = vld [vmem:[#allocation5 + $0x2a0] sm:$0xff]
    %v192 = vld [vmem:[#allocation5 + $0x2a8] sm:$0xff]
    %v193 = vld [vmem:[#allocation5 + $0x2b0] sm:$0xff]
    %v194 = vld [vmem:[#allocation5 + $0x2b8] sm:$0xff]
    %v195 = vld [vmem:[#allocation5 + $0x2c0] sm:$0xff]
    %v196 = vld [vmem:[#allocation5 + $0x2c8] sm:$0xff]
    %v197 = vld [vmem:[#allocation5 + $0x2d0] sm:$0xff]
    %v198 = vld [vmem:[#allocation5 + $0x2d8] sm:$0xff]
    %v199 = vld [vmem:[#allocation5 + $0x2e0] sm:$0xff]
    %v200 = vld [vmem:[#allocation5 + $0x2e8] sm:$0xff]
    %v201 = vld [vmem:[#allocation5 + $0x2f0] sm:$0xff]
    %v202 = vld [vmem:[#allocation5 + $0x2f8] sm:$0xff]
    %v203 = vld [vmem:[#allocation5 + $0x300] sm:$0xff]
    %v204 = vld [vmem:[#allocation5 + $0x308] sm:$0xff]
    %v205 = vld [vmem:[#allocation5 + $0x310] sm:$0xff]
    %v206 = vld [vmem:[#allocation5 + $0x318] sm:$0xff]
    %v207 = vld [vmem:[#allocation5 + $0x320] sm:$0xff]
    %v208 = vld [vmem:[#allocation5 + $0x328] sm:$0xff]
    %v209 = vld [vmem:[#allocation5 + $0x330] sm:$0xff]
    %v210 = vld [vmem:[#allocation5 + $0x338] sm:$0xff]
    %v211 = vld [vmem:[#allocation5 + $0x340] sm:$0xff]
    %v212 = vld [vmem:[#allocation5 + $0x348] sm:$0xff]
    %v213 = vld [vmem:[#allocation5 + $0x350] sm:$0xff]
    %v214 = vld [vmem:[#allocation5 + $0x358] sm:$0xff]
    %v215 = vld [vmem:[#allocation5 + $0x360] sm:$0xff]
    %v216 = vld [vmem:[#allocation5 + $0x368] sm:$0xff]
    %v217 = vld [vmem:[#allocation5 + $0x370] sm:$0xff]
    %v218 = vld [vmem:[#allocation5 + $0x378] sm:$0xff]
    %v219 = vld [vmem:[#allocation5 + $0x380] sm:$0xff]
    %v220 = vld [vmem:[#allocation5 + $0x388] sm:$0xff]
    %v221 = vld [vmem:[#allocation5 + $0x390] sm:$0xff]
    %v222 = vld [vmem:[#allocation5 + $0x398] sm:$0xff]
    %v223 = vld [vmem:[#allocation5 + $0x3a0] sm:$0xff]
    %v224 = vld [vmem:[#allocation5 + $0x3a8] sm:$0xff]
    %v225 = vld [vmem:[#allocation5 + $0x3b0] sm:$0xff]
    %v226 = vld [vmem:[#allocation5 + $0x3b8] sm:$0xff]
    %v227 = vld [vmem:[#allocation5 + $0x3c0] sm:$0xff]
    %v228 = vld [vmem:[#allocation5 + $0x3c8] sm:$0xff]
    %v229 = vld [vmem:[#allocation5 + $0x3d0] sm:$0xff]
    %v230 = vld [vmem:[#allocation5 + $0x3d8] sm:$0xff]
    %v231 = vld [vmem:[#allocation5 + $0x3e0] sm:$0xff]
    %v232 = vld [vmem:[#allocation5 + $0x3e8] sm:$0xff]
    %v233 = vld [vmem:[#allocation5 + $0x3f0] sm:$0xff]
    %v234 = vld [vmem:[#allocation5 + $0x3f8] sm:$0xff]
    %v235 = vld [vmem:[%s2] sm:$0x1]
    %v237 = vlaneseq
    %v238 = vshrl.u32 %v237, 7
    %v239 = vsub.s32 0, %v238
    %v240 = vrot.slane %v235, %v239
    %242 = vmatprep.subr.mxu0 0.0
    %243 = vmatpush1.msra.mxu0 %v122
    %244 = vmatprep.subr.mxu0 0.0
    %245 = vmatpush1.msra.mxu0 %v121
    %246 = vmatprep.subr.mxu0 0.0
    %247 = vmatpush1.msra.mxu0 %v120
    %248 = vmatprep.subr.mxu0 0.0
    %249 = vmatpush1.msra.mxu0 %v119
    %250 = vmatprep.subr.mxu0 0.0
    %251 = vmatpush1.msra.mxu0 %v118
    %252 = vmatprep.subr.mxu0 0.0
    %253 = vmatpush1.msra.mxu0 %v117
    %254 = vmatprep.subr.mxu0 0.0
    %255 = vmatpush1.msra.mxu0 %v116
    %256 = vmatprep.subr.mxu0 0.0
    %257 = vmatpush1.msra.mxu0 %v115
    %258 = vmatprep.subr.mxu0 0.0
    %259 = vmatpush1.msra.mxu0 %v114
    %260 = vmatprep.subr.mxu0 0.0
    %261 = vmatpush1.msra.mxu0 %v113
    %262 = vmatprep.subr.mxu0 0.0
    %263 = vmatpush1.msra.mxu0 %v112
    %264 = vmatprep.subr.mxu0 0.0
    %265 = vmatpush1.msra.mxu0 %v111
    %266 = vmatprep.subr.mxu0 0.0
    %267 = vmatpush1.msra.mxu0 %v110
    %268 = vmatprep.subr.mxu0 0.0
    %269 = vmatpush1.msra.mxu0 %v109
    %270 = vmatprep.subr.mxu0 0.0
    %271 = vmatpush1.msra.mxu0 %v108
    %272 = vmatprep.subr.mxu0 0.0
    %273 = vmatpush1.msra.mxu0 %v107
    %274 = vmatprep.subr.mxu0 0.0
    %275 = vmatpush2.msra.mxu0 %v138
    %276 = vmatprep.subr.mxu0 0.0
    %277 = vmatpush2.msra.mxu0 %v137
    %278 = vmatprep.subr.mxu0 0.0
    %279 = vmatpush2.msra.mxu0 %v136
    %280 = vmatprep.subr.mxu0 0.0
    %281 = vmatpush2.msra.mxu0 %v135
    %282 = vmatprep.subr.mxu0 0.0
    %283 = vmatpush2.msra.mxu0 %v134
    %284 = vmatprep.subr.mxu0 0.0
    %285 = vmatpush2.msra.mxu0 %v133
    %286 = vmatprep.subr.mxu0 0.0
    %287 = vmatpush2.msra.mxu0 %v132
    %288 = vmatprep.subr.mxu0 0.0
    %289 = vmatpush2.msra.mxu0 %v131
    %290 = vmatprep.subr.mxu0 0.0
    %291 = vmatpush2.msra.mxu0 %v130
    %292 = vmatprep.subr.mxu0 0.0
    %293 = vmatpush2.msra.mxu0 %v129
    %294 = vmatprep.subr.mxu0 0.0
    %295 = vmatpush2.msra.mxu0 %v128
    %296 = vmatprep.subr.mxu0 0.0
    %297 = vmatpush2.msra.mxu0 %v127
    %298 = vmatprep.subr.mxu0 0.0
    %299 = vmatpush2.msra.mxu0 %v126
    %300 = vmatprep.subr.mxu0 0.0
    %301 = vmatpush2.msra.mxu0 %v125
    %302 = vmatprep.subr.mxu0 0.0
    %303 = vmatpush2.msra.mxu0 %v124
    %304 = vmatprep.subr.mxu0 0.0
    %305 = vmatpush2.msra.mxu0 %v123
    %306 = vmatprep.mubr.f32.mxu0 %v100
    %307 = vmatmul.mubr.f32.gmra.mxu0 %v99
    %v308 = vpop.f32.mrf.mxu0
    %v309 = vadd.f32 %v240, %v308
    %v310 = vpop.f32.mrf.mxu0
    %311 = vdwg.mxu0
    %312 = vmatprep.subr.mxu0 0.0
    %313 = vmatpush1.msra.mxu0 %v154
    %314 = vmatprep.subr.mxu0 0.0
    %315 = vmatpush1.msra.mxu0 %v153
    %316 = vmatprep.subr.mxu0 0.0
    %317 = vmatpush1.msra.mxu0 %v152
    %318 = vmatprep.subr.mxu0 0.0
    %319 = vmatpush1.msra.mxu0 %v151
    %320 = vmatprep.subr.mxu0 0.0
    %321 = vmatpush1.msra.mxu0 %v150
    %322 = vmatprep.subr.mxu0 0.0
    %323 = vmatpush1.msra.mxu0 %v149
    %324 = vmatprep.subr.mxu0 0.0
    %325 = vmatpush1.msra.mxu0 %v148
    %326 = vmatprep.subr.mxu0 0.0
    %327 = vmatpush1.msra.mxu0 %v147
    %328 = vmatprep.subr.mxu0 0.0
    %329 = vmatpush1.msra.mxu0 %v146
    %330 = vmatprep.subr.mxu0 0.0
    %331 = vmatpush1.msra.mxu0 %v145
    %332 = vmatprep.subr.mxu0 0.0
    %333 = vmatpush1.msra.mxu0 %v144
    %334 = vmatprep.subr.mxu0 0.0
    %335 = vmatpush1.msra.mxu0 %v143
    %336 = vmatprep.subr.mxu0 0.0
    %337 = vmatpush1.msra.mxu0 %v142
    %338 = vmatprep.subr.mxu0 0.0
    %339 = vmatpush1.msra.mxu0 %v141
    %340 = vmatprep.subr.mxu0 0.0
    %341 = vmatpush1.msra.mxu0 %v140
    %342 = vmatprep.subr.mxu0 0.0
    %343 = vmatpush1.msra.mxu0 %v139
    %344 = vmatprep.subr.mxu0 0.0
    %345 = vmatpush2.msra.mxu0 %v170
    %346 = vmatprep.subr.mxu0 0.0
    %347 = vmatpush2.msra.mxu0 %v169
    %348 = vmatprep.subr.mxu0 0.0
    %349 = vmatpush2.msra.mxu0 %v168
    %350 = vmatprep.subr.mxu0 0.0
    %351 = vmatpush2.msra.mxu0 %v167
    %352 = vmatprep.subr.mxu0 0.0
    %353 = vmatpush2.msra.mxu0 %v166
    %354 = vmatprep.subr.mxu0 0.0
    %355 = vmatpush2.msra.mxu0 %v165
    %356 = vmatprep.subr.mxu0 0.0
    %357 = vmatpush2.msra.mxu0 %v164
    %358 = vmatprep.subr.mxu0 0.0
    %359 = vmatpush2.msra.mxu0 %v163
    %360 = vmatprep.subr.mxu0 0.0
    %361 = vmatpush2.msra.mxu0 %v162
    %362 = vmatprep.subr.mxu0 0.0
    %363 = vmatpush2.msra.mxu0 %v161
    %364 = vmatprep.subr.mxu0 0.0
    %365 = vmatpush2.msra.mxu0 %v160
    %366 = vmatprep.subr.mxu0 0.0
    %367 = vmatpush2.msra.mxu0 %v159
    %368 = vmatprep.subr.mxu0 0.0
    %369 = vmatpush2.msra.mxu0 %v158
    %370 = vmatprep.subr.mxu0 0.0
    %371 = vmatpush2.msra.mxu0 %v157
    %372 = vmatprep.subr.mxu0 0.0
    %373 = vmatpush2.msra.mxu0 %v156
    %374 = vmatprep.subr.mxu0 0.0
    %375 = vmatpush2.msra.mxu0 %v155
    %376 = vmatprep.mubr.f32.mxu0 %v102
    %377 = vmatmul.mubr.f32.gmra.mxu0 %v101
    %v378 = vpop.f32.mrf.mxu0
    %v379 = vadd.f32 %v309, %v378
    %v380 = vpop.f32.mrf.mxu0
    %381 = vdwg.mxu0
    %382 = vmatprep.subr.mxu0 0.0
    %383 = vmatpush1.msra.mxu0 %v186
    %384 = vmatprep.subr.mxu0 0.0
    %385 = vmatpush1.msra.mxu0 %v185
    %386 = vmatprep.subr.mxu0 0.0
    %387 = vmatpush1.msra.mxu0 %v184
    %388 = vmatprep.subr.mxu0 0.0
    %389 = vmatpush1.msra.mxu0 %v183
    %390 = vmatprep.subr.mxu0 0.0
    %391 = vmatpush1.msra.mxu0 %v182
    %392 = vmatprep.subr.mxu0 0.0
    %393 = vmatpush1.msra.mxu0 %v181
    %394 = vmatprep.subr.mxu0 0.0
    %395 = vmatpush1.msra.mxu0 %v180
    %396 = vmatprep.subr.mxu0 0.0
    %397 = vmatpush1.msra.mxu0 %v179
    %398 = vmatprep.subr.mxu0 0.0
    %399 = vmatpush1.msra.mxu0 %v178
    %400 = vmatprep.subr.mxu0 0.0
    %401 = vmatpush1.msra.mxu0 %v177
    %402 = vmatprep.subr.mxu0 0.0
    %403 = vmatpush1.msra.mxu0 %v176
    %404 = vmatprep.subr.mxu0 0.0
    %405 = vmatpush1.msra.mxu0 %v175
    %406 = vmatprep.subr.mxu0 0.0
    %407 = vmatpush1.msra.mxu0 %v174
    %408 = vmatprep.subr.mxu0 0.0
    %409 = vmatpush1.msra.mxu0 %v173
    %410 = vmatprep.subr.mxu0 0.0
    %411 = vmatpush1.msra.mxu0 %v172
    %412 = vmatprep.subr.mxu0 0.0
    %413 = vmatpush1.msra.mxu0 %v171
    %414 = vmatprep.subr.mxu0 0.0
    %415 = vmatpush2.msra.mxu0 %v202
    %416 = vmatprep.subr.mxu0 0.0
    %417 = vmatpush2.msra.mxu0 %v201
    %418 = vmatprep.subr.mxu0 0.0
    %419 = vmatpush2.msra.mxu0 %v200
    %420 = vmatprep.subr.mxu0 0.0
    %421 = vmatpush2.msra.mxu0 %v199
    %422 = vmatprep.subr.mxu0 0.0
    %423 = vmatpush2.msra.mxu0 %v198
    %424 = vmatprep.subr.mxu0 0.0
    %425 = vmatpush2.msra.mxu0 %v197
    %426 = vmatprep.subr.mxu0 0.0
    %427 = vmatpush2.msra.mxu0 %v196
    %428 = vmatprep.subr.mxu0 0.0
    %429 = vmatpush2.msra.mxu0 %v195
    %430 = vmatprep.subr.mxu0 0.0
    %431 = vmatpush2.msra.mxu0 %v194
    %432 = vmatprep.subr.mxu0 0.0
    %433 = vmatpush2.msra.mxu0 %v193
    %434 = vmatprep.subr.mxu0 0.0
    %435 = vmatpush2.msra.mxu0 %v192
    %436 = vmatprep.subr.mxu0 0.0
    %437 = vmatpush2.msra.mxu0 %v191
    %438 = vmatprep.subr.mxu0 0.0
    %439 = vmatpush2.msra.mxu0 %v190
    %440 = vmatprep.subr.mxu0 0.0
    %441 = vmatpush2.msra.mxu0 %v189
    %442 = vmatprep.subr.mxu0 0.0
    %443 = vmatpush2.msra.mxu0 %v188
    %444 = vmatprep.subr.mxu0 0.0
    %445 = vmatpush2.msra.mxu0 %v187
    %446 = vmatprep.mubr.f32.mxu0 %v104
    %447 = vmatmul.mubr.f32.gmra.mxu0 %v103
    %v448 = vpop.f32.mrf.mxu0
    %v449 = vadd.f32 %v379, %v448
    %v450 = vpop.f32.mrf.mxu0
    %451 = vdwg.mxu0
    %452 = vmatprep.subr.mxu0 0.0
    %453 = vmatpush1.msra.mxu0 %v218
    %454 = vmatprep.subr.mxu0 0.0
    %455 = vmatpush1.msra.mxu0 %v217
    %456 = vmatprep.subr.mxu0 0.0
    %457 = vmatpush1.msra.mxu0 %v216
    %458 = vmatprep.subr.mxu0 0.0
    %459 = vmatpush1.msra.mxu0 %v215
    %460 = vmatprep.subr.mxu0 0.0
    %461 = vmatpush1.msra.mxu0 %v214
    %462 = vmatprep.subr.mxu0 0.0
    %463 = vmatpush1.msra.mxu0 %v213
    %464 = vmatprep.subr.mxu0 0.0
    %465 = vmatpush1.msra.mxu0 %v212
    %466 = vmatprep.subr.mxu0 0.0
    %467 = vmatpush1.msra.mxu0 %v211
    %468 = vmatprep.subr.mxu0 0.0
    %469 = vmatpush1.msra.mxu0 %v210
    %470 = vmatprep.subr.mxu0 0.0
    %471 = vmatpush1.msra.mxu0 %v209
    %472 = vmatprep.subr.mxu0 0.0
    %473 = vmatpush1.msra.mxu0 %v208
    %474 = vmatprep.subr.mxu0 0.0
    %475 = vmatpush1.msra.mxu0 %v207
    %476 = vmatprep.subr.mxu0 0.0
    %477 = vmatpush1.msra.mxu0 %v206
    %478 = vmatprep.subr.mxu0 0.0
    %479 = vmatpush1.msra.mxu0 %v205
    %480 = vmatprep.subr.mxu0 0.0
    %481 = vmatpush1.msra.mxu0 %v204
    %482 = vmatprep.subr.mxu0 0.0
    %483 = vmatpush1.msra.mxu0 %v203
    %484 = vmatprep.subr.mxu0 0.0
    %485 = vmatpush2.msra.mxu0 %v234
    %486 = vmatprep.subr.mxu0 0.0
    %487 = vmatpush2.msra.mxu0 %v233
    %488 = vmatprep.subr.mxu0 0.0
    %489 = vmatpush2.msra.mxu0 %v232
    %490 = vmatprep.subr.mxu0 0.0
    %491 = vmatpush2.msra.mxu0 %v231
    %492 = vmatprep.subr.mxu0 0.0
    %493 = vmatpush2.msra.mxu0 %v230
    %494 = vmatprep.subr.mxu0 0.0
    %495 = vmatpush2.msra.mxu0 %v229
    %496 = vmatprep.subr.mxu0 0.0
    %497 = vmatpush2.msra.mxu0 %v228
    %498 = vmatprep.subr.mxu0 0.0
    %499 = vmatpush2.msra.mxu0 %v227
    %500 = vmatprep.subr.mxu0 0.0
    %501 = vmatpush2.msra.mxu0 %v226
    %502 = vmatprep.subr.mxu0 0.0
    %503 = vmatpush2.msra.mxu0 %v225
    %504 = vmatprep.subr.mxu0 0.0
    %505 = vmatpush2.msra.mxu0 %v224
    %506 = vmatprep.subr.mxu0 0.0
    %507 = vmatpush2.msra.mxu0 %v223
    %508 = vmatprep.subr.mxu0 0.0
    %509 = vmatpush2.msra.mxu0 %v222
    %510 = vmatprep.subr.mxu0 0.0
    %511 = vmatpush2.msra.mxu0 %v221
    %512 = vmatprep.subr.mxu0 0.0
    %513 = vmatpush2.msra.mxu0 %v220
    %514 = vmatprep.subr.mxu0 0.0
    %515 = vmatpush2.msra.mxu0 %v219
    %516 = vmatprep.mubr.f32.mxu0 %v106
    %517 = vmatmul.mubr.f32.gmra.mxu0 %v105
    %v518 = vpop.f32.mrf.mxu0
    %v519 = vadd.f32 %v449, %v518
    %v520 = vpop.f32.mrf.mxu0
    %521 = vdwg.mxu0
    %v522 = vmax.f32 %v519, 0.0
    %v523 = vld [vmem:[#allocation7] sm:$0xff]
    %v524 = vld [vmem:[#allocation7 + $0x8] sm:$0xff]
    %v525 = vld [vmem:[#allocation7 + $0x10] sm:$0xff]
    %v526 = vld [vmem:[#allocation7 + $0x18] sm:$0xff]
    %v527 = vld [vmem:[#allocation7 + $0x20] sm:$0xff]
    %v528 = vld [vmem:[#allocation7 + $0x28] sm:$0xff]
    %v529 = vld [vmem:[#allocation7 + $0x30] sm:$0xff]
    %v530 = vld [vmem:[#allocation7 + $0x38] sm:$0xff]
    %v531 = vld [vmem:[#allocation7 + $0x40] sm:$0xff]
    %v532 = vld [vmem:[#allocation7 + $0x48] sm:$0xff]
    %v533 = vld [vmem:[#allocation7 + $0x50] sm:$0xff]
    %v534 = vld [vmem:[#allocation7 + $0x58] sm:$0xff]
    %v535 = vld [vmem:[#allocation7 + $0x60] sm:$0xff]
    %v536 = vld [vmem:[#allocation7 + $0x68] sm:$0xff]
    %v537 = vld [vmem:[#allocation7 + $0x70] sm:$0xff]
    %v538 = vld [vmem:[#allocation7 + $0x78] sm:$0xff]
    %v539 = vld [vmem:[%s4] sm:$0x1]
    %v541 = vlaneseq
    %v542 = vshrl.u32 %v541, 7
    %v543 = vsub.s32 0, %v542
    %v544 = vrot.slane %v539, %v543
    %546 = vmatprep.subr.mxu0 0.0
    %547 = vmatpush1.msra.mxu0 %v538
    %548 = vmatprep.subr.mxu0 0.0
    %549 = vmatpush1.msra.mxu0 %v537
    %550 = vmatprep.subr.mxu0 0.0
    %551 = vmatpush1.msra.mxu0 %v536
    %552 = vmatprep.subr.mxu0 0.0
    %553 = vmatpush1.msra.mxu0 %v535
    %554 = vmatprep.subr.mxu0 0.0
    %555 = vmatpush1.msra.mxu0 %v534
    %556 = vmatprep.subr.mxu0 0.0
    %557 = vmatpush1.msra.mxu0 %v533
    %558 = vmatprep.subr.mxu0 0.0
    %559 = vmatpush1.msra.mxu0 %v532
    %560 = vmatprep.subr.mxu0 0.0
    %561 = vmatpush1.msra.mxu0 %v531
    %562 = vmatprep.subr.mxu0 0.0
    %563 = vmatpush1.msra.mxu0 %v530
    %564 = vmatprep.subr.mxu0 0.0
    %565 = vmatpush1.msra.mxu0 %v529
    %566 = vmatprep.subr.mxu0 0.0
    %567 = vmatpush1.msra.mxu0 %v528
    %568 = vmatprep.subr.mxu0 0.0
    %569 = vmatpush1.msra.mxu0 %v527
    %570 = vmatprep.subr.mxu0 0.0
    %571 = vmatpush1.msra.mxu0 %v526
    %572 = vmatprep.subr.mxu0 0.0
    %573 = vmatpush1.msra.mxu0 %v525
    %574 = vmatprep.subr.mxu0 0.0
    %575 = vmatpush1.msra.mxu0 %v524
    %576 = vmatprep.subr.mxu0 0.0
    %577 = vmatpush1.msra.mxu0 %v523
    %578 = vmatprep.subr.mxu0 0.0
    %579 = vmatpush2.msra.mxu0 0.0
    %580 = vmatprep.subr.mxu0 0.0
    %581 = vmatpush2.msra.mxu0 0.0
    %582 = vmatprep.subr.mxu0 0.0
    %583 = vmatpush2.msra.mxu0 0.0
    %584 = vmatprep.subr.mxu0 0.0
    %585 = vmatpush2.msra.mxu0 0.0
    %586 = vmatprep.subr.mxu0 0.0
    %587 = vmatpush2.msra.mxu0 0.0
    %588 = vmatprep.subr.mxu0 0.0
    %589 = vmatpush2.msra.mxu0 0.0
    %590 = vmatprep.subr.mxu0 0.0
    %591 = vmatpush2.msra.mxu0 0.0
    %592 = vmatprep.subr.mxu0 0.0
    %593 = vmatpush2.msra.mxu0 0.0
    %594 = vmatprep.subr.mxu0 0.0
    %595 = vmatpush2.msra.mxu0 0.0
    %596 = vmatprep.subr.mxu0 0.0
    %597 = vmatpush2.msra.mxu0 0.0
    %598 = vmatprep.subr.mxu0 0.0
    %599 = vmatpush2.msra.mxu0 0.0
    %600 = vmatprep.subr.mxu0 0.0
    %601 = vmatpush2.msra.mxu0 0.0
    %602 = vmatprep.subr.mxu0 0.0
    %603 = vmatpush2.msra.mxu0 0.0
    %604 = vmatprep.subr.mxu0 0.0
    %605 = vmatpush2.msra.mxu0 0.0
    %606 = vmatprep.subr.mxu0 0.0
    %607 = vmatpush2.msra.mxu0 0.0
    %608 = vmatprep.subr.mxu0 0.0
    %609 = vmatpush2.msra.mxu0 0.0
    %610 = vmatprep.mubr.f32.mxu0 0.0
    %611 = vmatmul.mubr.f32.gmra.mxu0 %v522
    %v612 = vpop.f32.mrf.mxu0
    %v613 = vadd.f32 %v544, %v612
    %v614 = vpop.f32.mrf.mxu0
    %615 = vdwg.mxu0
    %v616 = vmax.f32 %v613, 0.0
    %v617 = vld [vmem:[#allocation8] sm:$0xff]
    %v618 = vld [vmem:[#allocation8 + $0x8] sm:$0xff]
    %v619 = vld [vmem:[#allocation8 + $0x10] sm:$0xff]
    %v620 = vld [vmem:[#allocation8 + $0x18] sm:$0xff]
    %v621 = vld [vmem:[#allocation8 + $0x20] sm:$0xff]
    %v622 = vld [vmem:[#allocation8 + $0x28] sm:$0xff]
    %v623 = vld [vmem:[#allocation8 + $0x30] sm:$0xff]
    %v624 = vld [vmem:[#allocation8 + $0x38] sm:$0xff]
    %v625 = vld [vmem:[#allocation8 + $0x40] sm:$0xff]
    %v626 = vld [vmem:[#allocation8 + $0x48] sm:$0xff]
    %v627 = vld [vmem:[#allocation8 + $0x50] sm:$0xff]
    %v628 = vld [vmem:[#allocation8 + $0x58] sm:$0xff]
    %v629 = vld [vmem:[#allocation8 + $0x60] sm:$0xff]
    %v630 = vld [vmem:[#allocation8 + $0x68] sm:$0xff]
    %v631 = vld [vmem:[#allocation8 + $0x70] sm:$0xff]
    %v632 = vld [vmem:[#allocation8 + $0x78] sm:$0xff]
    %v633 = vld [vmem:[%s6] sm:$0x1]
    %v635 = vlaneseq
    %v636 = vshrl.u32 %v635, 7
    %v637 = vsub.s32 0, %v636
    %v638 = vrot.slane %v633, %v637
    %640 = vmatprep.subr.mxu0 0.0
    %641 = vmatpush1.msra.mxu0 %v632
    %642 = vmatprep.subr.mxu0 0.0
    %643 = vmatpush1.msra.mxu0 %v631
    %644 = vmatprep.subr.mxu0 0.0
    %645 = vmatpush1.msra.mxu0 %v630
    %646 = vmatprep.subr.mxu0 0.0
    %647 = vmatpush1.msra.mxu0 %v629
    %648 = vmatprep.subr.mxu0 0.0
    %649 = vmatpush1.msra.mxu0 %v628
    %650 = vmatprep.subr.mxu0 0.0
    %651 = vmatpush1.msra.mxu0 %v627
    %652 = vmatprep.subr.mxu0 0.0
    %653 = vmatpush1.msra.mxu0 %v626
    %654 = vmatprep.subr.mxu0 0.0
    %655 = vmatpush1.msra.mxu0 %v625
    %656 = vmatprep.subr.mxu0 0.0
    %657 = vmatpush1.msra.mxu0 %v624
    %658 = vmatprep.subr.mxu0 0.0
    %659 = vmatpush1.msra.mxu0 %v623
    %660 = vmatprep.subr.mxu0 0.0
    %661 = vmatpush1.msra.mxu0 %v622
    %662 = vmatprep.subr.mxu0 0.0
    %663 = vmatpush1.msra.mxu0 %v621
    %664 = vmatprep.subr.mxu0 0.0
    %665 = vmatpush1.msra.mxu0 %v620
    %666 = vmatprep.subr.mxu0 0.0
    %667 = vmatpush1.msra.mxu0 %v619
    %668 = vmatprep.subr.mxu0 0.0
    %669 = vmatpush1.msra.mxu0 %v618
    %670 = vmatprep.subr.mxu0 0.0
    %671 = vmatpush1.msra.mxu0 %v617
    %672 = vmatprep.subr.mxu0 0.0
    %673 = vmatpush2.msra.mxu0 0.0
    %674 = vmatprep.subr.mxu0 0.0
    %675 = vmatpush2.msra.mxu0 0.0
    %676 = vmatprep.subr.mxu0 0.0
    %677 = vmatpush2.msra.mxu0 0.0
    %678 = vmatprep.subr.mxu0 0.0
    %679 = vmatpush2.msra.mxu0 0.0
    %680 = vmatprep.subr.mxu0 0.0
    %681 = vmatpush2.msra.mxu0 0.0
    %682 = vmatprep.subr.mxu0 0.0
    %683 = vmatpush2.msra.mxu0 0.0
    %684 = vmatprep.subr.mxu0 0.0
    %685 = vmatpush2.msra.mxu0 0.0
    %686 = vmatprep.subr.mxu0 0.0
    %687 = vmatpush2.msra.mxu0 0.0
    %688 = vmatprep.subr.mxu0 0.0
    %689 = vmatpush2.msra.mxu0 0.0
    %690 = vmatprep.subr.mxu0 0.0
    %691 = vmatpush2.msra.mxu0 0.0
    %692 = vmatprep.subr.mxu0 0.0
    %693 = vmatpush2.msra.mxu0 0.0
    %694 = vmatprep.subr.mxu0 0.0
    %695 = vmatpush2.msra.mxu0 0.0
    %696 = vmatprep.subr.mxu0 0.0
    %697 = vmatpush2.msra.mxu0 0.0
    %698 = vmatprep.subr.mxu0 0.0
    %699 = vmatpush2.msra.mxu0 0.0
    %700 = vmatprep.subr.mxu0 0.0
    %701 = vmatpush2.msra.mxu0 0.0
    %702 = vmatprep.subr.mxu0 0.0
    %703 = vmatpush2.msra.mxu0 0.0
    %704 = vmatprep.mubr.f32.mxu0 0.0
    %705 = vmatmul.mubr.f32.gmra.mxu0 %v616
    %v706 = vpop.f32.mrf.mxu0
    %v707 = vadd.f32 %v638, %v706
    %v708 = vpop.f32.mrf.mxu0
    %709 = vdwg.mxu0
    %v710 = vmax.f32 %v707, 0.0
    %v711 = vld [vmem:[#allocation10] sm:$0xff]
    %v712 = vld [vmem:[#allocation10 + $0x8] sm:$0xff]
    %v713 = vld [vmem:[#allocation10 + $0x10] sm:$0xff]
    %v714 = vld [vmem:[#allocation10 + $0x18] sm:$0xff]
    %v715 = vld [vmem:[#allocation10 + $0x20] sm:$0xff]
    %v716 = vld [vmem:[#allocation10 + $0x28] sm:$0xff]
    %v717 = vld [vmem:[#allocation10 + $0x30] sm:$0xff]
    %v718 = vld [vmem:[#allocation10 + $0x38] sm:$0xff]
    %v719 = vld [vmem:[#allocation10 + $0x40] sm:$0xff]
    %v720 = vld [vmem:[#allocation10 + $0x48] sm:$0xff]
    %v721 = vld [vmem:[#allocation10 + $0x50] sm:$0xff]
    %v722 = vld [vmem:[#allocation10 + $0x58] sm:$0xff]
    %v723 = vld [vmem:[#allocation10 + $0x60] sm:$0xff]
    %v724 = vld [vmem:[#allocation10 + $0x68] sm:$0xff]
    %v725 = vld [vmem:[#allocation10 + $0x70] sm:$0xff]
    %v726 = vld [vmem:[#allocation10 + $0x78] sm:$0xff]
    %v727 = vld [vmem:[%s8] sm:$0x1]
    %v729 = vlaneseq
    %v730 = vshrl.u32 %v729, 7
    %v731 = vsub.s32 0, %v730
    %v732 = vrot.slane %v727, %v731
    %734 = vmatprep.subr.mxu0 0.0
    %735 = vmatpush1.msra.mxu0 %v726
    %736 = vmatprep.subr.mxu0 0.0
    %737 = vmatpush1.msra.mxu0 %v725
    %738 = vmatprep.subr.mxu0 0.0
    %739 = vmatpush1.msra.mxu0 %v724
    %740 = vmatprep.subr.mxu0 0.0
    %741 = vmatpush1.msra.mxu0 %v723
    %742 = vmatprep.subr.mxu0 0.0
    %743 = vmatpush1.msra.mxu0 %v722
    %744 = vmatprep.subr.mxu0 0.0
    %745 = vmatpush1.msra.mxu0 %v721
    %746 = vmatprep.subr.mxu0 0.0
    %747 = vmatpush1.msra.mxu0 %v720
    %748 = vmatprep.subr.mxu0 0.0
    %749 = vmatpush1.msra.mxu0 %v719
    %750 = vmatprep.subr.mxu0 0.0
    %751 = vmatpush1.msra.mxu0 %v718
    %752 = vmatprep.subr.mxu0 0.0
    %753 = vmatpush1.msra.mxu0 %v717
    %754 = vmatprep.subr.mxu0 0.0
    %755 = vmatpush1.msra.mxu0 %v716
    %756 = vmatprep.subr.mxu0 0.0
    %757 = vmatpush1.msra.mxu0 %v715
    %758 = vmatprep.subr.mxu0 0.0
    %759 = vmatpush1.msra.mxu0 %v714
    %760 = vmatprep.subr.mxu0 0.0
    %761 = vmatpush1.msra.mxu0 %v713
    %762 = vmatprep.subr.mxu0 0.0
    %763 = vmatpush1.msra.mxu0 %v712
    %764 = vmatprep.subr.mxu0 0.0
    %765 = vmatpush1.msra.mxu0 %v711
    %766 = vmatprep.subr.mxu0 0.0
    %767 = vmatpush2.msra.mxu0 0.0
    %768 = vmatprep.subr.mxu0 0.0
    %769 = vmatpush2.msra.mxu0 0.0
    %770 = vmatprep.subr.mxu0 0.0
    %771 = vmatpush2.msra.mxu0 0.0
    %772 = vmatprep.subr.mxu0 0.0
    %773 = vmatpush2.msra.mxu0 0.0
    %774 = vmatprep.subr.mxu0 0.0
    %775 = vmatpush2.msra.mxu0 0.0
    %776 = vmatprep.subr.mxu0 0.0
    %777 = vmatpush2.msra.mxu0 0.0
    %778 = vmatprep.subr.mxu0 0.0
    %779 = vmatpush2.msra.mxu0 0.0
    %780 = vmatprep.subr.mxu0 0.0
    %781 = vmatpush2.msra.mxu0 0.0
    %782 = vmatprep.subr.mxu0 0.0
    %783 = vmatpush2.msra.mxu0 0.0
    %784 = vmatprep.subr.mxu0 0.0
    %785 = vmatpush2.msra.mxu0 0.0
    %786 = vmatprep.subr.mxu0 0.0
    %787 = vmatpush2.msra.mxu0 0.0
    %788 = vmatprep.subr.mxu0 0.0
    %789 = vmatpush2.msra.mxu0 0.0
    %790 = vmatprep.subr.mxu0 0.0
    %791 = vmatpush2.msra.mxu0 0.0
    %792 = vmatprep.subr.mxu0 0.0
    %793 = vmatpush2.msra.mxu0 0.0
    %794 = vmatprep.subr.mxu0 0.0
    %795 = vmatpush2.msra.mxu0 0.0
    %796 = vmatprep.subr.mxu0 0.0
    %797 = vmatpush2.msra.mxu0 0.0
    %798 = vmatprep.mubr.f32.mxu0 0.0
    %799 = vmatmul.mubr.f32.gmra.mxu0 %v710
    %v800 = vpop.f32.mrf.mxu0
    %v801 = vadd.f32 %v732, %v800
    %v802 = vpop.f32.mrf.mxu0
    %803 = vdwg.mxu0
    %804 = vst [vmem:[#allocation11] sm:$0xff] %v801
    // Predicated region
    $region58: #{tpu_custom_call.1} parent=1 // pred_check
      _
    $region59: #{tpu_custom_call.1} parent=1 // pred_check_branch
      %806 = sbr.rel (0) target = $region61
    $region60: #{tpu_custom_call.1} parent=1 // pred_region
      %s808 = ssub.s32 128, 128
      %809 = vsyncadd [#allocation4], %s808
      %s811 = sshll.u32 [#allocation11], 4
      %s812 = int_to_ptr.vmem [resolvable:$true] %s811
      %814 = dma.vmem_to_hbm [thread:$0]  %s812, 128, %s9, [#allocation4]
    $region61: #{tpu_custom_call.1} parent=1 // pred_fallthru
      _
    // Predicated region
    $region62: #{tpu_custom_call.1} parent=1 // pred_check
      _
    $region63: #{tpu_custom_call.1} parent=1 // pred_check_branch
      %816 = sbr.rel (0) target = $region65
    $region64: #{tpu_custom_call.1} parent=1 // pred_region
      %817 = dma.done [#allocation4], 128
    $region65: #{tpu_custom_call.1} parent=1 // pred_fallthru
      _
    %818 = vsyncpa [#allocation3], 1
    %819 = vsyncpa [#allocation6], 1
    %820 = vsyncpa [#allocation9], 1
    %821 = vsyncpa [#allocation4], 1

</llo_original>
